<compile_context>
chip_gen: v7x
topology: tpu7x:2x2x1
jax: 0.10.0
libtpu: 0.0.40
codegen_flags: <defaults>
</compile_context>

<pallas_src>
import functools

import jax
import jax.numpy as jnp
import numpy as np
from jax.experimental import pallas as pl
from jax.experimental.pallas import tpu as pltpu

EPS1 = 0.1   # GIN layer-1 epsilon
EPS2 = 0.2   # GIN layer-2 epsilon

LANE = 128
SUBLANE = 8


def _round_up(v, m):
    return ((v + m - 1) // m) * m


def _pad2d(a, rows, cols):
    return jnp.pad(a, ((0, rows - a.shape[0]), (0, cols - a.shape[1])))


# ---------------------------------------------------------------------------
# Fused kernel: grid = (n_anchors,)
# ---------------------------------------------------------------------------
def _fused_kernel(num_classes,
                  # inputs
                  x_ref, a_hbm_ref, p_ref,
                  w1a_ref, b1a_ref, w1b_ref, b1b_ref,
                  w2a_top_ref, w2a_bot_ref, b2a_ref,
                  w2b_ref, b2b_ref, wc_ref, bc_ref,
                  # outputs
                  mu_cal_ref, std_ref,
                  # scratch
                  a_vmem, dma_sem, hpre_sc, base_sc, d_sc, dw_sc,
                  pbias_sc, preds_sc):
    n = pl.program_id(0)
    n_anchors = pl.num_programs(0)

    # ---- anchor-invariant precompute (runs once; results persist in scratch)
    @pl.when(n == 0)
    def _precompute():
        # One-shot DMA of the bf16 adjacency into single-buffered VMEM scratch.
        cp = pltpu.make_async_copy(a_hbm_ref, a_vmem, dma_sem.at[0])
        cp.start()
        cp.wait()
        a = a_vmem[...].astype(jnp.float32)          # {0,1} -> lossless

        # GIN layer 1 (forward_features_pre)
        x = x_ref[...]
        agg1 = (1.0 + EPS1) * x + jnp.dot(a, x, preferred_element_type=jnp.float32)
        h = jnp.maximum(
            jnp.dot(agg1, w1a_ref[...], preferred_element_type=jnp.float32)
            + b1a_ref[...], 0.0)
        hpre = (jnp.dot(h, w1b_ref[...], preferred_element_type=jnp.float32)
                + b1b_ref[...])
        hpre_sc[...] = hpre

        # Hoisted anchored layer-2 aggregation:
        #   new_feats     = [hpre - anc, anc]
        #   A @ new_feats = [A@hpre - deg*anc, deg*anc]
        #   agg @ w2a     = ((1+e)*hpre + A@hpre) @ w2a_top
        #                   + d * (anc @ (w2a_bot - w2a_top)),  d = (1+e) + deg
        s = (1.0 + EPS2) * hpre + jnp.dot(a, hpre,
                                          preferred_element_type=jnp.float32)
        base_sc[...] = jnp.dot(s, w2a_top_ref[...],
                               preferred_element_type=jnp.float32)
        d_sc[...] = (1.0 + EPS2) + jnp.sum(a, axis=1, keepdims=True)
        dw_sc[...] = w2a_bot_ref[...] - w2a_top_ref[...]
        # P @ broadcast(b2b) == rowsum(P) * b2b  (== b2b for mean pooling)
        pbias_sc[...] = jnp.sum(p_ref[...], axis=1, keepdims=True) * b2b_ref[...]

    # ---- per-anchor: rank-1 correction + ReLU + pool-first MLP + classifier
    anc = hpre_sc[pl.ds(n, 1), :]                                     # (1, Hp)
    corr = jnp.dot(anc, dw_sc[...], preferred_element_type=jnp.float32)   # (1, Hp)
    aggw = base_sc[...] + d_sc[...] * corr                            # (Np, Hp)
    h1 = jnp.maximum(aggw + b2a_ref[...], 0.0)
    # P @ (h1 @ w2b + b2b) == (P @ h1) @ w2b + rowsum(P)*b2b  (pool first: cheaper)
    ph1 = jnp.dot(p_ref[...], h1, preferred_element_type=jnp.float32)     # (Gp, Hp)
    h2p = (jnp.dot(ph1, w2b_ref[...], preferred_element_type=jnp.float32)
           + pbias_sc[...])
    logits = (jnp.dot(h2p, wc_ref[...], preferred_element_type=jnp.float32)
              + bc_ref[...])                                          # (Gp, Cp)
    preds_sc[n] = logits

    # ---- ensemble mean, unbiased sigmoid-std, calibrate (last anchor only)
    @pl.when(n == n_anchors - 1)
    def _finalize():
        preds = preds_sc[...]                                         # (A, Gp, Cp)
        na = preds.shape[0]
        mu = jnp.mean(preds, axis=0)
        sg = jax.nn.sigmoid(preds)
        m = jnp.mean(sg, axis=0)
        var = jnp.sum((sg - m) ** 2, axis=0) / (na - 1)               # unbiased std
        std = jnp.sqrt(var)
        # calibrate: c = mean(std) over the *real* classes (mask padded lanes)
        gp, cp = std.shape
        lane = jax.lax.broadcasted_iota(jnp.int32, (gp, cp), 1)
        mask = (lane < num_classes).astype(jnp.float32)
        c = jnp.sum(std * mask, axis=1, keepdims=True) * (1.0 / num_classes)
        mu_cal_ref[...] = mu * pl.reciprocal(1.0 + jnp.exp(c), approx=True)
        std_ref[...] = std


# ---------------------------------------------------------------------------
# Wrapper: pad to TPU-friendly shapes, launch the fused kernel, slice back.
# ---------------------------------------------------------------------------
@functools.partial(jax.jit, static_argnames=("n_anchors",))
def graph_ant_forward(x, A, P, params, n_anchors):
    if n_anchors < 2:
        # torch.std(dim=0, unbiased) is undefined for a single anchor.
        raise ValueError("n_anchors must be >= 2 so the anchor std is defined")

    N, Din = x.shape
    G = P.shape[0]
    H = params["w1b"].shape[1]
    C = params["wc"].shape[1]

    Np = _round_up(N, LANE)      # N is the lane dim of A and P
    Dp = _round_up(Din, LANE)
    Hp = _round_up(H, LANE)
    Cp = _round_up(C, LANE)
    Gp = _round_up(G, SUBLANE)

    x_p = _pad2d(x, Np, Dp)
    a_p = _pad2d(A, Np, Np).astype(jnp.bfloat16)   # {0,1}: lossless, half the bytes
    p_p = _pad2d(P, Gp, Np)

    w1a = _pad2d(params["w1a"], Dp, Hp)
    b1a = _pad2d(params["b1a"], 1, Hp)
    w1b = _pad2d(params["w1b"], Hp, Hp)
    b1b = _pad2d(params["b1b"], 1, Hp)
    w2a_top = _pad2d(params["w2a"][:H], Hp, Hp)
    w2a_bot = _pad2d(params["w2a"][H:], Hp, Hp)
    b2a = _pad2d(params["b2a"], 1, Hp)
    w2b = _pad2d(params["w2b"], Hp, Hp)
    b2b = _pad2d(params["b2b"], 1, Hp)
    wc = _pad2d(params["wc"], Hp, Cp)
    bc = _pad2d(params["bc"], 1, Cp)

    def full(shape):
        return pl.BlockSpec(shape, lambda n_, _s=len(shape): (0,) * _s)

    # Scheduling hint for XLA around the custom call.
    flops = (2 * Np * Np * (Dp + Hp)                     # A@x, A@hpre
             + 2 * Np * Dp * Hp + 2 * Np * Hp * Hp       # layer-1 MLP
             + 2 * Np * Hp * Hp                          # S @ w2a_top
             + n_anchors * (2 * Hp * Hp                  # anc @ (w2a_bot - w2a_top)
                            + 2 * Gp * Np * Hp           # P @ h1
                            + 2 * Gp * Hp * Hp           # @ w2b
                            + 2 * Gp * Hp * Cp))         # @ wc
    bytes_accessed = (a_p.size * 2 + x_p.size * 4 + p_p.size * 4
                      + 4 * (w1a.size + w1b.size + w2a_top.size + w2a_bot.size
                             + w2b.size + wc.size)
                      + 2 * Gp * Cp * 4)
    transcendentals = n_anchors * Gp * Cp + Gp

    kernel = functools.partial(_fused_kernel, C)

    mu_cal_p, std_p = pl.pallas_call(
        kernel,
        grid=(n_anchors,),
        in_specs=[
            full((Np, Dp)),                      # x
            pl.BlockSpec(memory_space=pl.ANY),   # A stays in HBM; copied once
            full((Gp, Np)),                      # P
            full((Dp, Hp)), full((1, Hp)), full((Hp, Hp)), full((1, Hp)),
            full((Hp, Hp)), full((Hp, Hp)), full((1, Hp)),
            full((Hp, Hp)), full((1, Hp)),
            full((Hp, Cp)), full((1, Cp)),
        ],
        out_specs=(full((Gp, Cp)), full((Gp, Cp))),
        out_shape=(jax.ShapeDtypeStruct((Gp, Cp), jnp.float32),
                   jax.ShapeDtypeStruct((Gp, Cp), jnp.float32)),
        scratch_shapes=[
            pltpu.VMEM((Np, Np), jnp.bfloat16),            # adjacency (1-buffered)
            pltpu.SemaphoreType.DMA((1,)),                 # its DMA semaphore
            pltpu.VMEM((Np, Hp), jnp.float32),             # hpre (anchors live here)
            pltpu.VMEM((Np, Hp), jnp.float32),             # hoisted base term
            pltpu.VMEM((Np, 1), jnp.float32),              # d = (1+eps2) + deg
            pltpu.VMEM((Hp, Hp), jnp.float32),             # w2a_bot - w2a_top
            pltpu.VMEM((Gp, Hp), jnp.float32),             # pooled bias
            pltpu.VMEM((n_anchors, Gp, Cp), jnp.float32),  # per-anchor logits
        ],
        compiler_params=pltpu.CompilerParams(
            dimension_semantics=("arbitrary",),            # carried ensemble state
            vmem_limit_bytes=48 * 1024 * 1024),
        cost_estimate=pl.CostEstimate(
            flops=int(flops), transcendentals=int(transcendentals),
            bytes_accessed=int(bytes_accessed)),
    )(x_p, a_p, p_p, w1a, b1a, w1b, b1b, w2a_top, w2a_bot, b2a, w2b, b2b, wc, bc)

    return mu_cal_p[:G, :C], std_p[:G, :C]


# ---------------------------------------------------------------------------
# Pure-JAX reference (matches the PyTorch module's forward with return_std=True)
# ---------------------------------------------------------------------------
def reference_forward(x, A, P, params, n_anchors):
    agg = (1.0 + EPS1) * x + A @ x
    h = jnp.maximum(agg @ params["w1a"] + params["b1a"], 0.0)
    hpre = h @ params["w1b"] + params["b1b"]
    anchors = hpre[:n_anchors]
    preds = []
    for n in range(n_anchors):
        anc = anchors[n:n + 1]
        nf = jnp.concatenate([hpre - anc, jnp.broadcast_to(anc, hpre.shape)], 1)
        agg2 = (1.0 + EPS2) * nf + A @ nf
        h1 = jnp.maximum(agg2 @ params["w2a"] + params["b2a"], 0.0)
        h2 = h1 @ params["w2b"] + params["b2b"]
        preds.append((P @ h2) @ params["wc"] + params["bc"])
    preds = jnp.stack(preds)
    mu = preds.mean(0)
    sg = jax.nn.sigmoid(preds)
    std = jnp.sqrt(jnp.sum((sg - sg.mean(0)) ** 2, 0) / (n_anchors - 1))
    c = std.mean(1, keepdims=True)
    return mu / (1.0 + jnp.exp(c)), std


if __name__ == "__main__":
    # Small shapes consistent with the module's forward
    G = 4              # num_graphs
    NPG = 8            # nodes per graph
    N = G * NPG        # total nodes = 32
    DIN = 16           # raw node feature dim
    H = 32             # hidden rep dim (stand-in for hidden_rep_dim=300)
    C = 10             # num_classes (module default)
    N_ANCHORS = 3

    ks = jax.random.split(jax.random.PRNGKey(0), 12)
    scale = 0.1
    params = {
        "w1a": scale * jax.random.normal(ks[0], (DIN, H), jnp.float32),
        "b1a": scale * jax.random.normal(ks[1], (1, H), jnp.float32),
        "w1b": scale * jax.random.normal(ks[2], (H, H), jnp.float32),
        "b1b": scale * jax.random.normal(ks[3], (1, H), jnp.float32),
        "w2a": scale * jax.random.normal(ks[4], (2 * H, H), jnp.float32),
        "b2a": scale * jax.random.normal(ks[5], (1, H), jnp.float32),
        "w2b": scale * jax.random.normal(ks[6], (H, H), jnp.float32),
        "b2b": scale * jax.random.normal(ks[7], (1, H), jnp.float32),
        "wc": scale * jax.random.normal(ks[8], (H, C), jnp.float32),
        "bc": scale * jax.random.normal(ks[9], (1, C), jnp.float32),
    }

    # Node features
    x = jax.random.normal(ks[10], (N, DIN), jnp.float32)

    # Deterministic ring graphs (one ring per graph), dense adjacency
    A_np = np.zeros((N, N), np.float32)
    for g in range(G):
        base = g * NPG
        for i in range(NPG):
            a, b = base + i, base + (i + 1) % NPG
            A_np[a, b] = 1.0
            A_np[b, a] = 1.0
    A = jnp.asarray(A_np)

    # Mean-pooling matrix from the batch-assignment vector
    P_np = np.zeros((G, N), np.float32)
    for g in range(G):
        P_np[g, g * NPG:(g + 1) * NPG] = 1.0 / NPG
    P = jnp.asarray(P_np)

    mu_cal, std = graph_ant_forward(x, A, P, params, N_ANCHORS)
    jax.block_until_ready((mu_cal, std))

    ref_mu, ref_std = reference_forward(x, A, P, params, N_ANCHORS)
    assert mu_cal.shape == (G, C) and std.shape == (G, C)
    # std has no approximate ops -> tight tolerance; mu_cal uses the EUP
    # approximate reciprocal for the calibration divide -> slightly looser.
    assert jnp.allclose(std, ref_std, atol=1e-4, rtol=1e-4)
    assert jnp.allclose(mu_cal, ref_mu, atol=2e-3, rtol=2e-3)
    print("KERNEL_OK")
</pallas_src>

<mosaic_0001>
module attributes {stable_mosaic.version = 11 : i64} {
  func.func @_fused_kernel(%arg0: i32, %arg1: memref<128x128xf32, #tpu.memory_space<vmem>>, %arg2: memref<128x128xbf16, #tpu.memory_space<any>>, %arg3: memref<8x128xf32, #tpu.memory_space<vmem>>, %arg4: memref<128x128xf32, #tpu.memory_space<vmem>>, %arg5: memref<1x128xf32, #tpu.memory_space<vmem>>, %arg6: memref<128x128xf32, #tpu.memory_space<vmem>>, %arg7: memref<1x128xf32, #tpu.memory_space<vmem>>, %arg8: memref<128x128xf32, #tpu.memory_space<vmem>>, %arg9: memref<128x128xf32, #tpu.memory_space<vmem>>, %arg10: memref<1x128xf32, #tpu.memory_space<vmem>>, %arg11: memref<128x128xf32, #tpu.memory_space<vmem>>, %arg12: memref<1x128xf32, #tpu.memory_space<vmem>>, %arg13: memref<128x128xf32, #tpu.memory_space<vmem>>, %arg14: memref<1x128xf32, #tpu.memory_space<vmem>>, %arg15: memref<8x128xf32, #tpu.memory_space<vmem>>, %arg16: memref<8x128xf32, #tpu.memory_space<vmem>>, %arg17: memref<128x128xbf16, #tpu.memory_space<vmem>>, %arg18: memref<1x!tpu.dma_semaphore, #tpu.memory_space<semaphore_mem>>, %arg19: memref<128x128xf32, #tpu.memory_space<vmem>>, %arg20: memref<128x128xf32, #tpu.memory_space<vmem>>, %arg21: memref<128x1xf32, #tpu.memory_space<vmem>>, %arg22: memref<128x128xf32, #tpu.memory_space<vmem>>, %arg23: memref<8x128xf32, #tpu.memory_space<vmem>>, %arg24: memref<3x8x128xf32, #tpu.memory_space<vmem>>) attributes {dimension_semantics = [#tpu.dimension_semantics<arbitrary>], iteration_bounds = array<i64: 3>, scalar_prefetch = 0 : i64, scratch_operands = 8 : i64, tpu.core_type = #tpu.core_type<tc>, window_params = [{pipeline_mode = #tpu.pipeline_mode<synchronous>, transform_indices = @transform_0, window_bounds = array<i64: 128, 128>}, {}, {pipeline_mode = #tpu.pipeline_mode<synchronous>, transform_indices = @transform_2, window_bounds = array<i64: 8, 128>}, {pipeline_mode = #tpu.pipeline_mode<synchronous>, transform_indices = @transform_3, window_bounds = array<i64: 128, 128>}, {pipeline_mode = #tpu.pipeline_mode<synchronous>, transform_indices = @transform_4, window_bounds = array<i64: 1, 128>}, {pipeline_mode = #tpu.pipeline_mode<synchronous>, transform_indices = @transform_5, window_bounds = array<i64: 128, 128>}, {pipeline_mode = #tpu.pipeline_mode<synchronous>, transform_indices = @transform_6, window_bounds = array<i64: 1, 128>}, {pipeline_mode = #tpu.pipeline_mode<synchronous>, transform_indices = @transform_7, window_bounds = array<i64: 128, 128>}, {pipeline_mode = #tpu.pipeline_mode<synchronous>, transform_indices = @transform_8, window_bounds = array<i64: 128, 128>}, {pipeline_mode = #tpu.pipeline_mode<synchronous>, transform_indices = @transform_9, window_bounds = array<i64: 1, 128>}, {pipeline_mode = #tpu.pipeline_mode<synchronous>, transform_indices = @transform_10, window_bounds = array<i64: 128, 128>}, {pipeline_mode = #tpu.pipeline_mode<synchronous>, transform_indices = @transform_11, window_bounds = array<i64: 1, 128>}, {pipeline_mode = #tpu.pipeline_mode<synchronous>, transform_indices = @transform_12, window_bounds = array<i64: 128, 128>}, {pipeline_mode = #tpu.pipeline_mode<synchronous>, transform_indices = @transform_13, window_bounds = array<i64: 1, 128>}, {pipeline_mode = #tpu.pipeline_mode<synchronous>, transform_indices = @transform_14, window_bounds = array<i64: 8, 128>}, {pipeline_mode = #tpu.pipeline_mode<synchronous>, transform_indices = @transform_15, window_bounds = array<i64: 8, 128>}]} {
    %c0_i32 = arith.constant 0 : i32
    %0 = arith.cmpi eq, %arg0, %c0_i32 : i32
    %1 = arith.extui %0 : i1 to i32
    %c0_i32_0 = arith.constant 0 : i32
    %2 = arith.cmpi ne, %1, %c0_i32_0 : i32
    scf.if %2 {
      %c0_i32_26 = arith.constant 0 : i32
      %36 = tpu.memref_slice %arg18[%c0_i32_26] : memref<1x!tpu.dma_semaphore, #tpu.memory_space<semaphore_mem>> -> memref<1x!tpu.dma_semaphore, #tpu.memory_space<semaphore_mem>>
      %37 = tpu.memref_squeeze %36 : memref<1x!tpu.dma_semaphore, #tpu.memory_space<semaphore_mem>> -> memref<!tpu.dma_semaphore, #tpu.memory_space<semaphore_mem>>
      tpu.enqueue_dma source(%arg2 : memref<128x128xbf16, #tpu.memory_space<any>>) target(%arg17 : memref<128x128xbf16, #tpu.memory_space<vmem>>) target_semaphore(%37 : memref<!tpu.dma_semaphore, #tpu.memory_space<semaphore_mem>>)
      %c0_i32_27 = arith.constant 0 : i32
      %38 = tpu.memref_slice %arg18[%c0_i32_27] : memref<1x!tpu.dma_semaphore, #tpu.memory_space<semaphore_mem>> -> memref<1x!tpu.dma_semaphore, #tpu.memory_space<semaphore_mem>>
      %39 = tpu.memref_squeeze %38 : memref<1x!tpu.dma_semaphore, #tpu.memory_space<semaphore_mem>> -> memref<!tpu.dma_semaphore, #tpu.memory_space<semaphore_mem>>
      tpu.wait_dma2 semaphore(%39 : memref<!tpu.dma_semaphore, #tpu.memory_space<semaphore_mem>>) src(%arg2 : memref<128x128xbf16, #tpu.memory_space<any>>) dst(%arg17 : memref<128x128xbf16, #tpu.memory_space<vmem>>)
      %c0_28 = arith.constant 0 : index
      %c0_29 = arith.constant 0 : index
      %40 = vector.load %arg17[%c0_28, %c0_29] : memref<128x128xbf16, #tpu.memory_space<vmem>>, vector<128x128xbf16>
      %41 = arith.extf %40 : vector<128x128xbf16> to vector<128x128xf32>
      %c0_30 = arith.constant 0 : index
      %c0_31 = arith.constant 0 : index
      %42 = vector.load %arg1[%c0_30, %c0_31] : memref<128x128xf32, #tpu.memory_space<vmem>>, vector<128x128xf32>
      %cst_32 = arith.constant 1.100000e+00 : f32
      %43 = vector.broadcast %cst_32 : f32 to vector<128x128xf32>
      %44 = arith.mulf %43, %42 : vector<128x128xf32>
      %cst_33 = arith.constant dense<0.000000e+00> : vector<128x128xf32>
      %45 = tpu.matmul %41, %42, %cst_33 {dimension_numbers = #tpu.dot_dimension_numbers<[1], [0], [0], [1], [0, 0, 1, 1], [], []>} : vector<128x128xf32>, vector<128x128xf32>, vector<128x128xf32> -> vector<128x128xf32>
      %46 = arith.addf %44, %45 : vector<128x128xf32>
      %c0_34 = arith.constant 0 : index
      %c0_35 = arith.constant 0 : index
      %47 = vector.load %arg4[%c0_34, %c0_35] : memref<128x128xf32, #tpu.memory_space<vmem>>, vector<128x128xf32>
      %cst_36 = arith.constant dense<0.000000e+00> : vector<128x128xf32>
      %48 = tpu.matmul %46, %47, %cst_36 {dimension_numbers = #tpu.dot_dimension_numbers<[1], [0], [0], [1], [0, 0, 1, 1], [], []>} : vector<128x128xf32>, vector<128x128xf32>, vector<128x128xf32> -> vector<128x128xf32>
      %c0_37 = arith.constant 0 : index
      %c0_38 = arith.constant 0 : index
      %49 = vector.load %arg5[%c0_37, %c0_38] : memref<1x128xf32, #tpu.memory_space<vmem>>, vector<1x128xf32>
      %50 = vector.broadcast %49 : vector<1x128xf32> to vector<128x128xf32>
      %51 = arith.addf %48, %50 : vector<128x128xf32>
      %cst_39 = arith.constant 0.000000e+00 : f32
      %52 = vector.broadcast %cst_39 : f32 to vector<128x128xf32>
      %53 = arith.maximumf %51, %52 : vector<128x128xf32>
      %c0_40 = arith.constant 0 : index
      %c0_41 = arith.constant 0 : index
      %54 = vector.load %arg6[%c0_40, %c0_41] : memref<128x128xf32, #tpu.memory_space<vmem>>, vector<128x128xf32>
      %cst_42 = arith.constant dense<0.000000e+00> : vector<128x128xf32>
      %55 = tpu.matmul %53, %54, %cst_42 {dimension_numbers = #tpu.dot_dimension_numbers<[1], [0], [0], [1], [0, 0, 1, 1], [], []>} : vector<128x128xf32>, vector<128x128xf32>, vector<128x128xf32> -> vector<128x128xf32>
      %c0_43 = arith.constant 0 : index
      %c0_44 = arith.constant 0 : index
      %56 = vector.load %arg7[%c0_43, %c0_44] : memref<1x128xf32, #tpu.memory_space<vmem>>, vector<1x128xf32>
      %57 = vector.broadcast %56 : vector<1x128xf32> to vector<128x128xf32>
      %58 = arith.addf %55, %57 : vector<128x128xf32>
      %c0_45 = arith.constant 0 : index
      %c0_46 = arith.constant 0 : index
      %59 = vector.load %arg19[%c0_45, %c0_46] : memref<128x128xf32, #tpu.memory_space<vmem>>, vector<128x128xf32>
      tpu.vector_store %arg19[%c0_45, %c0_46], %58 {strides = array<i32>} : memref<128x128xf32, #tpu.memory_space<vmem>>, vector<128x128xf32>,
      %cst_47 = arith.constant 1.200000e+00 : f32
      %60 = vector.broadcast %cst_47 : f32 to vector<128x128xf32>
      %61 = arith.mulf %60, %58 : vector<128x128xf32>
      %cst_48 = arith.constant dense<0.000000e+00> : vector<128x128xf32>
      %62 = tpu.matmul %41, %58, %cst_48 {dimension_numbers = #tpu.dot_dimension_numbers<[1], [0], [0], [1], [0, 0, 1, 1], [], []>} : vector<128x128xf32>, vector<128x128xf32>, vector<128x128xf32> -> vector<128x128xf32>
      %63 = arith.addf %61, %62 : vector<128x128xf32>
      %c0_49 = arith.constant 0 : index
      %c0_50 = arith.constant 0 : index
      %64 = vector.load %arg8[%c0_49, %c0_50] : memref<128x128xf32, #tpu.memory_space<vmem>>, vector<128x128xf32>
      %cst_51 = arith.constant dense<0.000000e+00> : vector<128x128xf32>
      %65 = tpu.matmul %63, %64, %cst_51 {dimension_numbers = #tpu.dot_dimension_numbers<[1], [0], [0], [1], [0, 0, 1, 1], [], []>} : vector<128x128xf32>, vector<128x128xf32>, vector<128x128xf32> -> vector<128x128xf32>
      %c0_52 = arith.constant 0 : index
      %c0_53 = arith.constant 0 : index
      %66 = vector.load %arg20[%c0_52, %c0_53] : memref<128x128xf32, #tpu.memory_space<vmem>>, vector<128x128xf32>
      tpu.vector_store %arg20[%c0_52, %c0_53], %65 {strides = array<i32>} : memref<128x128xf32, #tpu.memory_space<vmem>>, vector<128x128xf32>,
      %cst_54 = arith.constant dense<0.000000e+00> : vector<128xf32>
      %67 = vector.multi_reduction <add>, %41, %cst_54 [1] : vector<128x128xf32> to vector<128xf32>
      %68 = vector.shape_cast %67 : vector<128xf32> to vector<128x1xf32>
      %cst_55 = arith.constant 1.200000e+00 : f32
      %69 = vector.broadcast %cst_55 : f32 to vector<128x1xf32>
      %70 = arith.addf %69, %68 : vector<128x1xf32>
      %c0_56 = arith.constant 0 : index
      %c0_57 = arith.constant 0 : index
      %71 = vector.load %arg21[%c0_56, %c0_57] : memref<128x1xf32, #tpu.memory_space<vmem>>, vector<128x1xf32>
      tpu.vector_store %arg21[%c0_56, %c0_57], %70 {strides = array<i32>} : memref<128x1xf32, #tpu.memory_space<vmem>>, vector<128x1xf32>,
      %c0_58 = arith.constant 0 : index
      %c0_59 = arith.constant 0 : index
      %72 = vector.load %arg9[%c0_58, %c0_59] : memref<128x128xf32, #tpu.memory_space<vmem>>, vector<128x128xf32>
      %c0_60 = arith.constant 0 : index
      %c0_61 = arith.constant 0 : index
      %73 = vector.load %arg8[%c0_60, %c0_61] : memref<128x128xf32, #tpu.memory_space<vmem>>, vector<128x128xf32>
      %74 = arith.subf %72, %73 : vector<128x128xf32>
      %c0_62 = arith.constant 0 : index
      %c0_63 = arith.constant 0 : index
      %75 = vector.load %arg22[%c0_62, %c0_63] : memref<128x128xf32, #tpu.memory_space<vmem>>, vector<128x128xf32>
      tpu.vector_store %arg22[%c0_62, %c0_63], %74 {strides = array<i32>} : memref<128x128xf32, #tpu.memory_space<vmem>>, vector<128x128xf32>,
      %c0_64 = arith.constant 0 : index
      %c0_65 = arith.constant 0 : index
      %76 = vector.load %arg3[%c0_64, %c0_65] : memref<8x128xf32, #tpu.memory_space<vmem>>, vector<8x128xf32>
      %cst_66 = arith.constant dense<0.000000e+00> : vector<8xf32>
      %77 = vector.multi_reduction <add>, %76, %cst_66 [1] : vector<8x128xf32> to vector<8xf32>
      %78 = vector.shape_cast %77 : vector<8xf32> to vector<8x1xf32>
      %c0_67 = arith.constant 0 : index
      %c0_68 = arith.constant 0 : index
      %79 = vector.load %arg12[%c0_67, %c0_68] : memref<1x128xf32, #tpu.memory_space<vmem>>, vector<1x128xf32>
      %80 = vector.broadcast %78 : vector<8x1xf32> to vector<8x128xf32>
      %81 = vector.broadcast %79 : vector<1x128xf32> to vector<8x128xf32>
      %82 = arith.mulf %80, %81 : vector<8x128xf32>
      %c0_69 = arith.constant 0 : index
      %c0_70 = arith.constant 0 : index
      %83 = vector.load %arg23[%c0_69, %c0_70] : memref<8x128xf32, #tpu.memory_space<vmem>>, vector<8x128xf32>
      tpu.vector_store %arg23[%c0_69, %c0_70], %82 {strides = array<i32>} : memref<8x128xf32, #tpu.memory_space<vmem>>, vector<8x128xf32>,
    } else {
    }
    %3 = arith.index_cast %arg0 : i32 to index
    %c0 = arith.constant 0 : index
    %4 = vector.load %arg19[%3, %c0] : memref<128x128xf32, #tpu.memory_space<vmem>>, vector<1x128xf32>
    %c0_1 = arith.constant 0 : index
    %c0_2 = arith.constant 0 : index
    %5 = vector.load %arg22[%c0_1, %c0_2] : memref<128x128xf32, #tpu.memory_space<vmem>>, vector<128x128xf32>
    %cst = arith.constant dense<0.000000e+00> : vector<1x128xf32>
    %6 = tpu.matmul %4, %5, %cst {dimension_numbers = #tpu.dot_dimension_numbers<[1], [0], [0], [1], [0, 0, 1, 1], [], []>} : vector<1x128xf32>, vector<128x128xf32>, vector<1x128xf32> -> vector<1x128xf32>
    %c0_3 = arith.constant 0 : index
    %c0_4 = arith.constant 0 : index
    %7 = vector.load %arg20[%c0_3, %c0_4] : memref<128x128xf32, #tpu.memory_space<vmem>>, vector<128x128xf32>
    %c0_5 = arith.constant 0 : index
    %c0_6 = arith.constant 0 : index
    %8 = vector.load %arg21[%c0_5, %c0_6] : memref<128x1xf32, #tpu.memory_space<vmem>>, vector<128x1xf32>
    %9 = vector.broadcast %8 : vector<128x1xf32> to vector<128x128xf32>
    %10 = vector.broadcast %6 : vector<1x128xf32> to vector<128x128xf32>
    %11 = arith.mulf %9, %10 : vector<128x128xf32>
    %12 = arith.addf %7, %11 : vector<128x128xf32>
    %c0_7 = arith.constant 0 : index
    %c0_8 = arith.constant 0 : index
    %13 = vector.load %arg10[%c0_7, %c0_8] : memref<1x128xf32, #tpu.memory_space<vmem>>, vector<1x128xf32>
    %14 = vector.broadcast %13 : vector<1x128xf32> to vector<128x128xf32>
    %15 = arith.addf %12, %14 : vector<128x128xf32>
    %cst_9 = arith.constant 0.000000e+00 : f32
    %16 = vector.broadcast %cst_9 : f32 to vector<128x128xf32>
    %17 = arith.maximumf %15, %16 : vector<128x128xf32>
    %c0_10 = arith.constant 0 : index
    %c0_11 = arith.constant 0 : index
    %18 = vector.load %arg3[%c0_10, %c0_11] : memref<8x128xf32, #tpu.memory_space<vmem>>, vector<8x128xf32>
    %cst_12 = arith.constant dense<0.000000e+00> : vector<8x128xf32>
    %19 = tpu.matmul %18, %17, %cst_12 {dimension_numbers = #tpu.dot_dimension_numbers<[1], [0], [0], [1], [0, 0, 1, 1], [], []>} : vector<8x128xf32>, vector<128x128xf32>, vector<8x128xf32> -> vector<8x128xf32>
    %c0_13 = arith.constant 0 : index
    %c0_14 = arith.constant 0 : index
    %20 = vector.load %arg11[%c0_13, %c0_14] : memref<128x128xf32, #tpu.memory_space<vmem>>, vector<128x128xf32>
    %cst_15 = arith.constant dense<0.000000e+00> : vector<8x128xf32>
    %21 = tpu.matmul %19, %20, %cst_15 {dimension_numbers = #tpu.dot_dimension_numbers<[1], [0], [0], [1], [0, 0, 1, 1], [], []>} : vector<8x128xf32>, vector<128x128xf32>, vector<8x128xf32> -> vector<8x128xf32>
    %c0_16 = arith.constant 0 : index
    %c0_17 = arith.constant 0 : index
    %22 = vector.load %arg23[%c0_16, %c0_17] : memref<8x128xf32, #tpu.memory_space<vmem>>, vector<8x128xf32>
    %23 = arith.addf %21, %22 : vector<8x128xf32>
    %c0_18 = arith.constant 0 : index
    %c0_19 = arith.constant 0 : index
    %24 = vector.load %arg13[%c0_18, %c0_19] : memref<128x128xf32, #tpu.memory_space<vmem>>, vector<128x128xf32>
    %cst_20 = arith.constant dense<0.000000e+00> : vector<8x128xf32>
    %25 = tpu.matmul %23, %24, %cst_20 {dimension_numbers = #tpu.dot_dimension_numbers<[1], [0], [0], [1], [0, 0, 1, 1], [], []>} : vector<8x128xf32>, vector<128x128xf32>, vector<8x128xf32> -> vector<8x128xf32>
    %c0_21 = arith.constant 0 : index
    %c0_22 = arith.constant 0 : index
    %26 = vector.load %arg14[%c0_21, %c0_22] : memref<1x128xf32, #tpu.memory_space<vmem>>, vector<1x128xf32>
    %27 = vector.broadcast %26 : vector<1x128xf32> to vector<8x128xf32>
    %28 = arith.addf %25, %27 : vector<8x128xf32>
    %29 = arith.index_cast %arg0 : i32 to index
    %c0_23 = arith.constant 0 : index
    %c0_24 = arith.constant 0 : index
    %30 = vector.load %arg24[%29, %c0_23, %c0_24] : memref<3x8x128xf32, #tpu.memory_space<vmem>>, vector<1x8x128xf32>
    %31 = vector.shape_cast %30 : vector<1x8x128xf32> to vector<8x128xf32>
    %32 = vector.shape_cast %28 : vector<8x128xf32> to vector<1x8x128xf32>
    tpu.vector_store %arg24[%29, %c0_23, %c0_24], %32 {strides = array<i32>} : memref<3x8x128xf32, #tpu.memory_space<vmem>>, vector<1x8x128xf32>,
    %c2_i32 = arith.constant 2 : i32
    %33 = arith.cmpi eq, %arg0, %c2_i32 : i32
    %34 = arith.extui %33 : i1 to i32
    %c0_i32_25 = arith.constant 0 : i32
    %35 = arith.cmpi ne, %34, %c0_i32_25 : i32
    scf.if %35 {
      %c0_26 = arith.constant 0 : index
      %c0_27 = arith.constant 0 : index
      %c0_28 = arith.constant 0 : index
      %36 = vector.load %arg24[%c0_26, %c0_27, %c0_28] : memref<3x8x128xf32, #tpu.memory_space<vmem>>, vector<3x8x128xf32>
      %cst_29 = arith.constant dense<0.000000e+00> : vector<8x128xf32>
      %37 = vector.multi_reduction <add>, %36, %cst_29 [0] : vector<3x8x128xf32> to vector<8x128xf32>
      %cst_30 = arith.constant 3.000000e+00 : f32
      %38 = vector.broadcast %cst_30 : f32 to vector<8x128xf32>
      %39 = arith.divf %37, %38 : vector<8x128xf32>
      %40 = arith.negf %36 : vector<3x8x128xf32>
      %41 = math.exp %40 : vector<3x8x128xf32>
      %cst_31 = arith.constant 1.000000e+00 : f32
      %42 = vector.broadcast %cst_31 : f32 to vector<3x8x128xf32>
      %43 = arith.addf %42, %41 : vector<3x8x128xf32>
      %44 = arith.divf %42, %43 : vector<3x8x128xf32>
      %cst_32 = arith.constant dense<0.000000e+00> : vector<8x128xf32>
      %45 = vector.multi_reduction <add>, %44, %cst_32 [0] : vector<3x8x128xf32> to vector<8x128xf32>
      %cst_33 = arith.constant 3.000000e+00 : f32
      %46 = vector.broadcast %cst_33 : f32 to vector<8x128xf32>
      %47 = arith.divf %45, %46 : vector<8x128xf32>
      %48 = vector.shape_cast %47 : vector<8x128xf32> to vector<1x8x128xf32>
      %49 = vector.broadcast %48 : vector<1x8x128xf32> to vector<3x8x128xf32>
      %50 = arith.subf %44, %49 : vector<3x8x128xf32>
      %51 = arith.mulf %50, %50 : vector<3x8x128xf32>
      %cst_34 = arith.constant dense<0.000000e+00> : vector<8x128xf32>
      %52 = vector.multi_reduction <add>, %51, %cst_34 [0] : vector<3x8x128xf32> to vector<8x128xf32>
      %cst_35 = arith.constant 2.000000e+00 : f32
      %53 = vector.broadcast %cst_35 : f32 to vector<8x128xf32>
      %54 = arith.divf %52, %53 : vector<8x128xf32>
      %55 = math.sqrt %54 : vector<8x128xf32>
      %56 = tpu.iota {dimensions = array<i32: 1>} : vector<8x128xi32>
      %c10_i32 = arith.constant 10 : i32
      %57 = vector.broadcast %c10_i32 : i32 to vector<8x128xi32>
      %58 = arith.cmpi slt, %56, %57 : vector<8x128xi32>
      %59 = arith.extui %58 : vector<8x128xi1> to vector<8x128xi32>
      %60 = arith.sitofp %59 : vector<8x128xi32> to vector<8x128xf32>
      %61 = arith.mulf %55, %60 : vector<8x128xf32>
      %cst_36 = arith.constant dense<0.000000e+00> : vector<8xf32>
      %62 = vector.multi_reduction <add>, %61, %cst_36 [1] : vector<8x128xf32> to vector<8xf32>
      %63 = vector.shape_cast %62 : vector<8xf32> to vector<8x1xf32>
      %cst_37 = arith.constant 1.000000e-01 : f32
      %64 = vector.broadcast %cst_37 : f32 to vector<8x1xf32>
      %65 = arith.mulf %63, %64 : vector<8x1xf32>
      %66 = math.exp %65 : vector<8x1xf32>
      %cst_38 = arith.constant 1.000000e+00 : f32
      %67 = vector.broadcast %cst_38 : f32 to vector<8x1xf32>
      %68 = arith.addf %67, %66 : vector<8x1xf32>
      %69 = tpu.reciprocal %68 {approx = true} : vector<8x1xf32> -> vector<8x1xf32>
      %70 = vector.broadcast %69 : vector<8x1xf32> to vector<8x128xf32>
      %71 = arith.mulf %39, %70 : vector<8x128xf32>
      %c0_39 = arith.constant 0 : index
      %c0_40 = arith.constant 0 : index
      %72 = vector.load %arg15[%c0_39, %c0_40] : memref<8x128xf32, #tpu.memory_space<vmem>>, vector<8x128xf32>
      tpu.vector_store %arg15[%c0_39, %c0_40], %71 {strides = array<i32>} : memref<8x128xf32, #tpu.memory_space<vmem>>, vector<8x128xf32>,
      %c0_41 = arith.constant 0 : index
      %c0_42 = arith.constant 0 : index
      %73 = vector.load %arg16[%c0_41, %c0_42] : memref<8x128xf32, #tpu.memory_space<vmem>>, vector<8x128xf32>
      tpu.vector_store %arg16[%c0_41, %c0_42], %55 {strides = array<i32>} : memref<8x128xf32, #tpu.memory_space<vmem>>, vector<8x128xf32>,
    } else {
    }
    return
  }
  func.func @transform_0(%arg0: i32) -> (i32, i32) {
    %c0_i32 = arith.constant 0 : i32
    %c0_i32_0 = arith.constant 0 : i32
    %c0_i32_1 = arith.constant 0 : i32
    return %c0_i32, %c0_i32_0 : i32, i32
  }
  func.func @transform_2(%arg0: i32) -> (i32, i32) {
    %c0_i32 = arith.constant 0 : i32
    %c0_i32_0 = arith.constant 0 : i32
    %c0_i32_1 = arith.constant 0 : i32
    return %c0_i32, %c0_i32_0 : i32, i32
  }
  func.func @transform_3(%arg0: i32) -> (i32, i32) {
    %c0_i32 = arith.constant 0 : i32
    %c0_i32_0 = arith.constant 0 : i32
    %c0_i32_1 = arith.constant 0 : i32
    return %c0_i32, %c0_i32_0 : i32, i32
  }
  func.func @transform_4(%arg0: i32) -> (i32, i32) {
    %c0_i32 = arith.constant 0 : i32
    %c0_i32_0 = arith.constant 0 : i32
    %c0_i32_1 = arith.constant 0 : i32
    return %c0_i32, %c0_i32_0 : i32, i32
  }
  func.func @transform_5(%arg0: i32) -> (i32, i32) {
    %c0_i32 = arith.constant 0 : i32
    %c0_i32_0 = arith.constant 0 : i32
    %c0_i32_1 = arith.constant 0 : i32
    return %c0_i32, %c0_i32_0 : i32, i32
  }
  func.func @transform_6(%arg0: i32) -> (i32, i32) {
    %c0_i32 = arith.constant 0 : i32
    %c0_i32_0 = arith.constant 0 : i32
    %c0_i32_1 = arith.constant 0 : i32
    return %c0_i32, %c0_i32_0 : i32, i32
  }
  func.func @transform_7(%arg0: i32) -> (i32, i32) {
    %c0_i32 = arith.constant 0 : i32
    %c0_i32_0 = arith.constant 0 : i32
    %c0_i32_1 = arith.constant 0 : i32
    return %c0_i32, %c0_i32_0 : i32, i32
  }
  func.func @transform_8(%arg0: i32) -> (i32, i32) {
    %c0_i32 = arith.constant 0 : i32
    %c0_i32_0 = arith.constant 0 : i32
    %c0_i32_1 = arith.constant 0 : i32
    return %c0_i32, %c0_i32_0 : i32, i32
  }
  func.func @transform_9(%arg0: i32) -> (i32, i32) {
    %c0_i32 = arith.constant 0 : i32
    %c0_i32_0 = arith.constant 0 : i32
    %c0_i32_1 = arith.constant 0 : i32
    return %c0_i32, %c0_i32_0 : i32, i32
  }
  func.func @transform_10(%arg0: i32) -> (i32, i32) {
    %c0_i32 = arith.constant 0 : i32
    %c0_i32_0 = arith.constant 0 : i32
    %c0_i32_1 = arith.constant 0 : i32
    return %c0_i32, %c0_i32_0 : i32, i32
  }
  func.func @transform_11(%arg0: i32) -> (i32, i32) {
    %c0_i32 = arith.constant 0 : i32
    %c0_i32_0 = arith.constant 0 : i32
    %c0_i32_1 = arith.constant 0 : i32
    return %c0_i32, %c0_i32_0 : i32, i32
  }
  func.func @transform_12(%arg0: i32) -> (i32, i32) {
    %c0_i32 = arith.constant 0 : i32
    %c0_i32_0 = arith.constant 0 : i32
    %c0_i32_1 = arith.constant 0 : i32
    return %c0_i32, %c0_i32_0 : i32, i32
  }
  func.func @transform_13(%arg0: i32) -> (i32, i32) {
    %c0_i32 = arith.constant 0 : i32
    %c0_i32_0 = arith.constant 0 : i32
    %c0_i32_1 = arith.constant 0 : i32
    return %c0_i32, %c0_i32_0 : i32, i32
  }
  func.func @transform_14(%arg0: i32) -> (i32, i32) {
    %c0_i32 = arith.constant 0 : i32
    %c0_i32_0 = arith.constant 0 : i32
    %c0_i32_1 = arith.constant 0 : i32
    return %c0_i32, %c0_i32_0 : i32, i32
  }
  func.func @transform_15(%arg0: i32) -> (i32, i32) {
    %c0_i32 = arith.constant 0 : i32
    %c0_i32_0 = arith.constant 0 : i32
    %c0_i32_1 = arith.constant 0 : i32
    return %c0_i32, %c0_i32_0 : i32, i32
  }
}

</mosaic_0001>

<llo_original>
// kernel: graph_ant_forward.1
$region0: #{graph_ant_forward.1}
  #allocation0 [shape = 'u32[]', space=smem, size = 0x4, offset = 0x4, fixed_abs, tag = 'smem constant byte address 0x4 - core index']
  #allocation1 [shape = 'u32[144,128]{1,0:T(1,128)}', space=vmem, size = 0x12000, scoped, tag = 'internal scratch']
  #allocation2 [shape = 'bf16[128,128]{1,0:T(16,128)(2,1)}', space=vmem, size = 0x8000, scoped, tag = 'scratch operand']
  #allocation3 [shape = 's32[1]{0}', space=sflag, size = 0x4, scoped, tag = 'scratch operand']
  #allocation4 [shape = 'f32[128,128]{1,0:T(8,128)}', space=vmem, size = 0x10000, scoped, tag = 'scratch operand']
  #allocation5 [shape = 'f32[128,128]{1,0:T(8,128)}', space=vmem, size = 0x10000, scoped, tag = 'scratch operand']
  #allocation6 [shape = 'f32[128,1]{1,0:T(8,128)}', space=vmem, size = 0x10000, scoped, tag = 'scratch operand']
  #allocation7 [shape = 'f32[128,128]{1,0:T(8,128)}', space=vmem, size = 0x10000, scoped, tag = 'scratch operand']
  #allocation8 [shape = 'f32[8,128]{1,0:T(8,128)}', space=vmem, size = 0x1000, scoped, tag = 'scratch operand']
  #allocation9 [shape = 'f32[3,8,128]{2,1,0:T(8,128)}', space=vmem, size = 0x3000, scoped, tag = 'scratch operand']
  #allocation10 [shape = 's32[]', space=sflag, size = 0x4, offset = 0, fixed_abs, tag = 'sflag constant byte address 0x0 - dummy sync flag']
  %s0 = inlined_call_operand.vmem [shape: f32[128,128], index: 0, kind: input, shape index: {}]
  %s1 = inlined_call_operand.vmem [shape: bf16[128,128], index: 1, kind: input, shape index: {}]
  %s2 = inlined_call_operand.vmem [shape: f32[8,128], index: 2, kind: input, shape index: {}]
  %s3 = inlined_call_operand.vmem [shape: f32[128,128], index: 3, kind: input, shape index: {}]
  %s4 = inlined_call_operand.vmem [shape: f32[1,128], index: 4, kind: input, shape index: {}]
  %s5 = inlined_call_operand.vmem [shape: f32[128,128], index: 5, kind: input, shape index: {}]
  %s6 = inlined_call_operand.vmem [shape: f32[1,128], index: 6, kind: input, shape index: {}]
  %s7 = inlined_call_operand.vmem [shape: f32[128,128], index: 7, kind: input, shape index: {}]
  %s8 = inlined_call_operand.vmem [shape: f32[128,128], index: 8, kind: input, shape index: {}]
  %s9 = inlined_call_operand.vmem [shape: f32[1,128], index: 9, kind: input, shape index: {}]
  %s10 = inlined_call_operand.vmem [shape: f32[128,128], index: 10, kind: input, shape index: {}]
  %s11 = inlined_call_operand.vmem [shape: f32[1,128], index: 11, kind: input, shape index: {}]
  %s12 = inlined_call_operand.vmem [shape: f32[128,128], index: 12, kind: input, shape index: {}]
  %s13 = inlined_call_operand.vmem [shape: f32[1,128], index: 13, kind: input, shape index: {}]
  %s14 = inlined_call_operand.vmem [shape: f32[8,128], index: 14, kind: output, shape index: {0}]
  %s15 = inlined_call_operand.vmem [shape: f32[8,128], index: 15, kind: output, shape index: {1}]
  %16 = xla_tuple %s14, %s15
  %s17 = sld [smem:[#allocation0]]
  $region135: #{graph_ant_forward.1} parent=0
    _
  %s19 = ssub.s32 1, %s17
  %s20 = scalar_select 0, %s19, %s17
  loop: start=0, step=1, limit=5
  $region2: #{graph_ant_forward.1} parent=0 // loop_pre_header
    _
  $region3: #{graph_ant_forward.1} parent=0 // loop_header
    %s22 = sphi 0, %s26
    %p23 = scmp.ge.s32.totalorder %s22, 5
    %s30 = sphi 0, %s30
    %s32 = sphi 0, %s30
    %s33 = sphi 0, %s32
    %s47 = sphi 0, %s33
    %s51 = sphi 0, %s51
    %s53 = sphi 0, %s51
    %s54 = sphi 0, %s53
    %s68 = sphi 0, %s54
    %s72 = sphi 0, %s72
    %s74 = sphi 0, %s72
    %s75 = sphi 0, %s74
    %s89 = sphi 0, %s75
    %s93 = sphi 0, %s93
    %s95 = sphi 0, %s93
    %s96 = sphi 0, %s95
    %s110 = sphi 0, %s96
    %s114 = sphi 0, %s114
    %s116 = sphi 0, %s114
    %s117 = sphi 0, %s116
    %s131 = sphi 0, %s117
    %s135 = sphi 0, %s135
    %s137 = sphi 0, %s135
    %s138 = sphi 0, %s137
    %s152 = sphi 0, %s138
    %s156 = sphi 0, %s156
    %s158 = sphi 0, %s156
    %s159 = sphi 0, %s158
    %s173 = sphi 0, %s159
    %s177 = sphi 0, %s177
    %s179 = sphi 0, %s177
    %s180 = sphi 0, %s179
    %s194 = sphi 0, %s180
    %s198 = sphi 0, %s198
    %s200 = sphi 0, %s198
    %s201 = sphi 0, %s200
    %s215 = sphi 0, %s201
    %s219 = sphi 0, %s219
    %s221 = sphi 0, %s219
    %s222 = sphi 0, %s221
    %s236 = sphi 0, %s222
    %s240 = sphi 0, %s240
    %s242 = sphi 0, %s240
    %s243 = sphi 0, %s242
    %s257 = sphi 0, %s243
    %s261 = sphi 0, %s261
    %s263 = sphi 0, %s261
    %s264 = sphi 0, %s263
    %s278 = sphi 0, %s264
    %s282 = sphi 0, %s282
    %s284 = sphi 0, %s282
    %s285 = sphi 0, %s284
    %s299 = sphi 0, %s285
    %s303 = sphi 0, %s303
    %s305 = sphi 0, %s303
    %s306 = sphi 0, %s305
    %s320 = sphi 0, %s306
    %s324 = sphi 0, %s324
    %s326 = sphi 0, %s324
    %s327 = sphi 0, %s326
    %s341 = sphi 0, %s327
  $region4: #{graph_ant_forward.1} parent=0 // loop_header_branch
    %25 = sbr.rel (%p23) target = $region8
  $region5: #{graph_ant_forward.1} parent=0 // loop_body
    %s27 = ssub.s32 %s22, 1
    %s28 = ssub.s32 %s22, 2
    %s29 = sadd.s32 %s22, 1
    %s31 = sadd.s32 %s30, 1
    %p34 = scmp.eq.s32.totalorder %s22, 2
    %p35 = scmp.ne.s32.totalorder %s30, %s32
    %p36 = scmp.eq.s32.totalorder %s22, 0
    %p37 = por %p35, %p36
    %p38 = scmp.ne.s32.totalorder %s30, %s32
    %p39 = scmp.eq.s32.totalorder %s27, 2
    %p40 = por %p38, %p39
    %p41 = scmp.ne.s32.totalorder %s32, %s33
    %p42 = scmp.eq.s32.totalorder %s27, 0
    %p43 = por %p41, %p42
    %p44 = scmp.ne.s32.totalorder %s32, %s33
    %p45 = scmp.eq.s32.totalorder %s28, 2
    %p46 = por %p44, %p45
    %p48 = scmp.ne.s32.totalorder %s33, %s47
    %p49 = scmp.eq.s32.totalorder %s28, 0
    %p50 = por %p48, %p49
    %s52 = sadd.s32 %s51, 1
    %p55 = scmp.eq.s32.totalorder %s22, 2
    %p56 = scmp.ne.s32.totalorder %s51, %s53
    %p57 = scmp.eq.s32.totalorder %s22, 0
    %p58 = por %p56, %p57
    %p59 = scmp.ne.s32.totalorder %s51, %s53
    %p60 = scmp.eq.s32.totalorder %s27, 2
    %p61 = por %p59, %p60
    %p62 = scmp.ne.s32.totalorder %s53, %s54
    %p63 = scmp.eq.s32.totalorder %s27, 0
    %p64 = por %p62, %p63
    %p65 = scmp.ne.s32.totalorder %s53, %s54
    %p66 = scmp.eq.s32.totalorder %s28, 2
    %p67 = por %p65, %p66
    %p69 = scmp.ne.s32.totalorder %s54, %s68
    %p70 = scmp.eq.s32.totalorder %s28, 0
    %p71 = por %p69, %p70
    %s73 = sadd.s32 %s72, 1
    %p76 = scmp.eq.s32.totalorder %s22, 2
    %p77 = scmp.ne.s32.totalorder %s72, %s74
    %p78 = scmp.eq.s32.totalorder %s22, 0
    %p79 = por %p77, %p78
    %p80 = scmp.ne.s32.totalorder %s72, %s74
    %p81 = scmp.eq.s32.totalorder %s27, 2
    %p82 = por %p80, %p81
    %p83 = scmp.ne.s32.totalorder %s74, %s75
    %p84 = scmp.eq.s32.totalorder %s27, 0
    %p85 = por %p83, %p84
    %p86 = scmp.ne.s32.totalorder %s74, %s75
    %p87 = scmp.eq.s32.totalorder %s28, 2
    %p88 = por %p86, %p87
    %p90 = scmp.ne.s32.totalorder %s75, %s89
    %p91 = scmp.eq.s32.totalorder %s28, 0
    %p92 = por %p90, %p91
    %s94 = sadd.s32 %s93, 1
    %p97 = scmp.eq.s32.totalorder %s22, 2
    %p98 = scmp.ne.s32.totalorder %s93, %s95
    %p99 = scmp.eq.s32.totalorder %s22, 0
    %p100 = por %p98, %p99
    %p101 = scmp.ne.s32.totalorder %s93, %s95
    %p102 = scmp.eq.s32.totalorder %s27, 2
    %p103 = por %p101, %p102
    %p104 = scmp.ne.s32.totalorder %s95, %s96
    %p105 = scmp.eq.s32.totalorder %s27, 0
    %p106 = por %p104, %p105
    %p107 = scmp.ne.s32.totalorder %s95, %s96
    %p108 = scmp.eq.s32.totalorder %s28, 2
    %p109 = por %p107, %p108
    %p111 = scmp.ne.s32.totalorder %s96, %s110
    %p112 = scmp.eq.s32.totalorder %s28, 0
    %p113 = por %p111, %p112
    %s115 = sadd.s32 %s114, 1
    %p118 = scmp.eq.s32.totalorder %s22, 2
    %p119 = scmp.ne.s32.totalorder %s114, %s116
    %p120 = scmp.eq.s32.totalorder %s22, 0
    %p121 = por %p119, %p120
    %p122 = scmp.ne.s32.totalorder %s114, %s116
    %p123 = scmp.eq.s32.totalorder %s27, 2
    %p124 = por %p122, %p123
    %p125 = scmp.ne.s32.totalorder %s116, %s117
    %p126 = scmp.eq.s32.totalorder %s27, 0
    %p127 = por %p125, %p126
    %p128 = scmp.ne.s32.totalorder %s116, %s117
    %p129 = scmp.eq.s32.totalorder %s28, 2
    %p130 = por %p128, %p129
    %p132 = scmp.ne.s32.totalorder %s117, %s131
    %p133 = scmp.eq.s32.totalorder %s28, 0
    %p134 = por %p132, %p133
    %s136 = sadd.s32 %s135, 1
    %p139 = scmp.eq.s32.totalorder %s22, 2
    %p140 = scmp.ne.s32.totalorder %s135, %s137
    %p141 = scmp.eq.s32.totalorder %s22, 0
    %p142 = por %p140, %p141
    %p143 = scmp.ne.s32.totalorder %s135, %s137
    %p144 = scmp.eq.s32.totalorder %s27, 2
    %p145 = por %p143, %p144
    %p146 = scmp.ne.s32.totalorder %s137, %s138
    %p147 = scmp.eq.s32.totalorder %s27, 0
    %p148 = por %p146, %p147
    %p149 = scmp.ne.s32.totalorder %s137, %s138
    %p150 = scmp.eq.s32.totalorder %s28, 2
    %p151 = por %p149, %p150
    %p153 = scmp.ne.s32.totalorder %s138, %s152
    %p154 = scmp.eq.s32.totalorder %s28, 0
    %p155 = por %p153, %p154
    %s157 = sadd.s32 %s156, 1
    %p160 = scmp.eq.s32.totalorder %s22, 2
    %p161 = scmp.ne.s32.totalorder %s156, %s158
    %p162 = scmp.eq.s32.totalorder %s22, 0
    %p163 = por %p161, %p162
    %p164 = scmp.ne.s32.totalorder %s156, %s158
    %p165 = scmp.eq.s32.totalorder %s27, 2
    %p166 = por %p164, %p165
    %p167 = scmp.ne.s32.totalorder %s158, %s159
    %p168 = scmp.eq.s32.totalorder %s27, 0
    %p169 = por %p167, %p168
    %p170 = scmp.ne.s32.totalorder %s158, %s159
    %p171 = scmp.eq.s32.totalorder %s28, 2
    %p172 = por %p170, %p171
    %p174 = scmp.ne.s32.totalorder %s159, %s173
    %p175 = scmp.eq.s32.totalorder %s28, 0
    %p176 = por %p174, %p175
    %s178 = sadd.s32 %s177, 1
    %p181 = scmp.eq.s32.totalorder %s22, 2
    %p182 = scmp.ne.s32.totalorder %s177, %s179
    %p183 = scmp.eq.s32.totalorder %s22, 0
    %p184 = por %p182, %p183
    %p185 = scmp.ne.s32.totalorder %s177, %s179
    %p186 = scmp.eq.s32.totalorder %s27, 2
    %p187 = por %p185, %p186
    %p188 = scmp.ne.s32.totalorder %s179, %s180
    %p189 = scmp.eq.s32.totalorder %s27, 0
    %p190 = por %p188, %p189
    %p191 = scmp.ne.s32.totalorder %s179, %s180
    %p192 = scmp.eq.s32.totalorder %s28, 2
    %p193 = por %p191, %p192
    %p195 = scmp.ne.s32.totalorder %s180, %s194
    %p196 = scmp.eq.s32.totalorder %s28, 0
    %p197 = por %p195, %p196
    %s199 = sadd.s32 %s198, 1
    %p202 = scmp.eq.s32.totalorder %s22, 2
    %p203 = scmp.ne.s32.totalorder %s198, %s200
    %p204 = scmp.eq.s32.totalorder %s22, 0
    %p205 = por %p203, %p204
    %p206 = scmp.ne.s32.totalorder %s198, %s200
    %p207 = scmp.eq.s32.totalorder %s27, 2
    %p208 = por %p206, %p207
    %p209 = scmp.ne.s32.totalorder %s200, %s201
    %p210 = scmp.eq.s32.totalorder %s27, 0
    %p211 = por %p209, %p210
    %p212 = scmp.ne.s32.totalorder %s200, %s201
    %p213 = scmp.eq.s32.totalorder %s28, 2
    %p214 = por %p212, %p213
    %p216 = scmp.ne.s32.totalorder %s201, %s215
    %p217 = scmp.eq.s32.totalorder %s28, 0
    %p218 = por %p216, %p217
    %s220 = sadd.s32 %s219, 1
    %p223 = scmp.eq.s32.totalorder %s22, 2
    %p224 = scmp.ne.s32.totalorder %s219, %s221
    %p225 = scmp.eq.s32.totalorder %s22, 0
    %p226 = por %p224, %p225
    %p227 = scmp.ne.s32.totalorder %s219, %s221
    %p228 = scmp.eq.s32.totalorder %s27, 2
    %p229 = por %p227, %p228
    %p230 = scmp.ne.s32.totalorder %s221, %s222
    %p231 = scmp.eq.s32.totalorder %s27, 0
    %p232 = por %p230, %p231
    %p233 = scmp.ne.s32.totalorder %s221, %s222
    %p234 = scmp.eq.s32.totalorder %s28, 2
    %p235 = por %p233, %p234
    %p237 = scmp.ne.s32.totalorder %s222, %s236
    %p238 = scmp.eq.s32.totalorder %s28, 0
    %p239 = por %p237, %p238
    %s241 = sadd.s32 %s240, 1
    %p244 = scmp.eq.s32.totalorder %s22, 2
    %p245 = scmp.ne.s32.totalorder %s240, %s242
    %p246 = scmp.eq.s32.totalorder %s22, 0
    %p247 = por %p245, %p246
    %p248 = scmp.ne.s32.totalorder %s240, %s242
    %p249 = scmp.eq.s32.totalorder %s27, 2
    %p250 = por %p248, %p249
    %p251 = scmp.ne.s32.totalorder %s242, %s243
    %p252 = scmp.eq.s32.totalorder %s27, 0
    %p253 = por %p251, %p252
    %p254 = scmp.ne.s32.totalorder %s242, %s243
    %p255 = scmp.eq.s32.totalorder %s28, 2
    %p256 = por %p254, %p255
    %p258 = scmp.ne.s32.totalorder %s243, %s257
    %p259 = scmp.eq.s32.totalorder %s28, 0
    %p260 = por %p258, %p259
    %s262 = sadd.s32 %s261, 1
    %p265 = scmp.eq.s32.totalorder %s22, 2
    %p266 = scmp.ne.s32.totalorder %s261, %s263
    %p267 = scmp.eq.s32.totalorder %s22, 0
    %p268 = por %p266, %p267
    %p269 = scmp.ne.s32.totalorder %s261, %s263
    %p270 = scmp.eq.s32.totalorder %s27, 2
    %p271 = por %p269, %p270
    %p272 = scmp.ne.s32.totalorder %s263, %s264
    %p273 = scmp.eq.s32.totalorder %s27, 0
    %p274 = por %p272, %p273
    %p275 = scmp.ne.s32.totalorder %s263, %s264
    %p276 = scmp.eq.s32.totalorder %s28, 2
    %p277 = por %p275, %p276
    %p279 = scmp.ne.s32.totalorder %s264, %s278
    %p280 = scmp.eq.s32.totalorder %s28, 0
    %p281 = por %p279, %p280
    %s283 = sadd.s32 %s282, 1
    %p286 = scmp.eq.s32.totalorder %s22, 2
    %p287 = scmp.ne.s32.totalorder %s282, %s284
    %p288 = scmp.eq.s32.totalorder %s22, 0
    %p289 = por %p287, %p288
    %p290 = scmp.ne.s32.totalorder %s282, %s284
    %p291 = scmp.eq.s32.totalorder %s27, 2
    %p292 = por %p290, %p291
    %p293 = scmp.ne.s32.totalorder %s284, %s285
    %p294 = scmp.eq.s32.totalorder %s27, 0
    %p295 = por %p293, %p294
    %p296 = scmp.ne.s32.totalorder %s284, %s285
    %p297 = scmp.eq.s32.totalorder %s28, 2
    %p298 = por %p296, %p297
    %p300 = scmp.ne.s32.totalorder %s285, %s299
    %p301 = scmp.eq.s32.totalorder %s28, 0
    %p302 = por %p300, %p301
    %s304 = sadd.s32 %s303, 1
    %p307 = scmp.eq.s32.totalorder %s22, 2
    %p308 = scmp.ne.s32.totalorder %s303, %s305
    %p309 = scmp.eq.s32.totalorder %s22, 0
    %p310 = por %p308, %p309
    %p311 = scmp.ne.s32.totalorder %s303, %s305
    %p312 = scmp.eq.s32.totalorder %s27, 2
    %p313 = por %p311, %p312
    %p314 = scmp.ne.s32.totalorder %s305, %s306
    %p315 = scmp.eq.s32.totalorder %s27, 0
    %p316 = por %p314, %p315
    %p317 = scmp.ne.s32.totalorder %s305, %s306
    %p318 = scmp.eq.s32.totalorder %s28, 2
    %p319 = por %p317, %p318
    %p321 = scmp.ne.s32.totalorder %s306, %s320
    %p322 = scmp.eq.s32.totalorder %s28, 0
    %p323 = por %p321, %p322
    %s325 = sadd.s32 %s324, 1
    %p328 = scmp.eq.s32.totalorder %s22, 2
    %p329 = scmp.ne.s32.totalorder %s324, %s326
    %p330 = scmp.eq.s32.totalorder %s22, 0
    %p331 = por %p329, %p330
    %p332 = scmp.ne.s32.totalorder %s324, %s326
    %p333 = scmp.eq.s32.totalorder %s27, 2
    %p334 = por %p332, %p333
    %p335 = scmp.ne.s32.totalorder %s326, %s327
    %p336 = scmp.eq.s32.totalorder %s27, 0
    %p337 = por %p335, %p336
    %p338 = scmp.ne.s32.totalorder %s326, %s327
    %p339 = scmp.eq.s32.totalorder %s28, 2
    %p340 = por %p338, %p339
    %p342 = scmp.ne.s32.totalorder %s327, %s341
    %p343 = scmp.eq.s32.totalorder %s28, 0
    %p344 = por %p342, %p343
    %p345 = scmp.le.s32.totalorder 1, %s22
    %p346 = scmp.lt.s32.totalorder %s22, 4
    %p347 = pnand %p345, %p346
    %p348 = pneg %p347
    // Predicated region
    $region9: #{graph_ant_forward.1} parent=5 // pred_check
      _
    $region10: #{graph_ant_forward.1} parent=5 // pred_check_branch
      %350 = sbr.rel (%p347) target = $region12
    $region11: #{graph_ant_forward.1} parent=5 // pred_region
      %s351 = ssub.s32 %s22, 1
      // Predicated region
      $region13: #{graph_ant_forward.1} parent=11 // pred_check
        %p352 = pneg %p43
      $region14: #{graph_ant_forward.1} parent=11 // pred_check_branch
        %354 = sbr.rel (%p352) target = $region16
      $region15: #{graph_ant_forward.1} parent=11 // pred_region
        _
      $region16: #{graph_ant_forward.1} parent=11 // pred_fallthru
        _
      // Predicated region
      $region17: #{graph_ant_forward.1} parent=11 // pred_check
        %p355 = pneg %p64
      $region18: #{graph_ant_forward.1} parent=11 // pred_check_branch
        %357 = sbr.rel (%p355) target = $region20
      $region19: #{graph_ant_forward.1} parent=11 // pred_region
        _
      $region20: #{graph_ant_forward.1} parent=11 // pred_fallthru
        _
      // Predicated region
      $region21: #{graph_ant_forward.1} parent=11 // pred_check
        %p358 = pneg %p85
      $region22: #{graph_ant_forward.1} parent=11 // pred_check_branch
        %360 = sbr.rel (%p358) target = $region24
      $region23: #{graph_ant_forward.1} parent=11 // pred_region
        _
      $region24: #{graph_ant_forward.1} parent=11 // pred_fallthru
        _
      // Predicated region
      $region25: #{graph_ant_forward.1} parent=11 // pred_check
        %p361 = pneg %p106
      $region26: #{graph_ant_forward.1} parent=11 // pred_check_branch
        %363 = sbr.rel (%p361) target = $region28
      $region27: #{graph_ant_forward.1} parent=11 // pred_region
        _
      $region28: #{graph_ant_forward.1} parent=11 // pred_fallthru
        _
      // Predicated region
      $region29: #{graph_ant_forward.1} parent=11 // pred_check
        %p364 = pneg %p127
      $region30: #{graph_ant_forward.1} parent=11 // pred_check_branch
        %366 = sbr.rel (%p364) target = $region32
      $region31: #{graph_ant_forward.1} parent=11 // pred_region
        _
      $region32: #{graph_ant_forward.1} parent=11 // pred_fallthru
        _
      // Predicated region
      $region33: #{graph_ant_forward.1} parent=11 // pred_check
        %p367 = pneg %p148
      $region34: #{graph_ant_forward.1} parent=11 // pred_check_branch
        %369 = sbr.rel (%p367) target = $region36
      $region35: #{graph_ant_forward.1} parent=11 // pred_region
        _
      $region36: #{graph_ant_forward.1} parent=11 // pred_fallthru
        _
      // Predicated region
      $region37: #{graph_ant_forward.1} parent=11 // pred_check
        %p370 = pneg %p169
      $region38: #{graph_ant_forward.1} parent=11 // pred_check_branch
        %372 = sbr.rel (%p370) target = $region40
      $region39: #{graph_ant_forward.1} parent=11 // pred_region
        _
      $region40: #{graph_ant_forward.1} parent=11 // pred_fallthru
        _
      // Predicated region
      $region41: #{graph_ant_forward.1} parent=11 // pred_check
        %p373 = pneg %p190
      $region42: #{graph_ant_forward.1} parent=11 // pred_check_branch
        %375 = sbr.rel (%p373) target = $region44
      $region43: #{graph_ant_forward.1} parent=11 // pred_region
        _
      $region44: #{graph_ant_forward.1} parent=11 // pred_fallthru
        _
      // Predicated region
      $region45: #{graph_ant_forward.1} parent=11 // pred_check
        %p376 = pneg %p211
      $region46: #{graph_ant_forward.1} parent=11 // pred_check_branch
        %378 = sbr.rel (%p376) target = $region48
      $region47: #{graph_ant_forward.1} parent=11 // pred_region
        _
      $region48: #{graph_ant_forward.1} parent=11 // pred_fallthru
        _
      // Predicated region
      $region49: #{graph_ant_forward.1} parent=11 // pred_check
        %p379 = pneg %p232
      $region50: #{graph_ant_forward.1} parent=11 // pred_check_branch
        %381 = sbr.rel (%p379) target = $region52
      $region51: #{graph_ant_forward.1} parent=11 // pred_region
        _
      $region52: #{graph_ant_forward.1} parent=11 // pred_fallthru
        _
      // Predicated region
      $region53: #{graph_ant_forward.1} parent=11 // pred_check
        %p382 = pneg %p253
      $region54: #{graph_ant_forward.1} parent=11 // pred_check_branch
        %384 = sbr.rel (%p382) target = $region56
      $region55: #{graph_ant_forward.1} parent=11 // pred_region
        _
      $region56: #{graph_ant_forward.1} parent=11 // pred_fallthru
        _
      // Predicated region
      $region57: #{graph_ant_forward.1} parent=11 // pred_check
        %p385 = pneg %p274
      $region58: #{graph_ant_forward.1} parent=11 // pred_check_branch
        %387 = sbr.rel (%p385) target = $region60
      $region59: #{graph_ant_forward.1} parent=11 // pred_region
        _
      $region60: #{graph_ant_forward.1} parent=11 // pred_fallthru
        _
      // Predicated region
      $region61: #{graph_ant_forward.1} parent=11 // pred_check
        %p388 = pneg %p295
      $region62: #{graph_ant_forward.1} parent=11 // pred_check_branch
        %390 = sbr.rel (%p388) target = $region64
      $region63: #{graph_ant_forward.1} parent=11 // pred_region
        _
      $region64: #{graph_ant_forward.1} parent=11 // pred_fallthru
        _
    $region12: #{graph_ant_forward.1} parent=5 // pred_fallthru
      _
    %p391 = scmp.lt.s32.totalorder %s22, 3
    // Predicated region
    $region65: #{graph_ant_forward.1} parent=5 // pred_check
      %p392 = pneg %p391
    $region66: #{graph_ant_forward.1} parent=5 // pred_check_branch
      %394 = sbr.rel (%p392) target = $region68
    $region67: #{graph_ant_forward.1} parent=5 // pred_region
      _
    $region68: #{graph_ant_forward.1} parent=5 // pred_fallthru
      _
    %p395 = scmp.le.s32.totalorder 1, %s22
    %p396 = scmp.lt.s32.totalorder %s22, 4
    %p397 = pnand %p395, %p396
    %p398 = pneg %p397
    // Predicated region
    $region69: #{graph_ant_forward.1} parent=5 // pred_check
      _
    $region70: #{graph_ant_forward.1} parent=5 // pred_check_branch
      %400 = sbr.rel (%p397) target = $region72
    $region71: #{graph_ant_forward.1} parent=5 // pred_region
      %s401 = ssub.s32 %s22, 1
      %p402 = pneg %p43
      %p403 = pneg %p40
      %p404 = pneg %p64
      %p405 = pneg %p61
      %p406 = pneg %p85
      %p407 = pneg %p82
      %p408 = pneg %p106
      %p409 = pneg %p103
      %p410 = pneg %p127
      %p411 = pneg %p124
      %p412 = pneg %p148
      %p413 = pneg %p145
      %p414 = pneg %p169
      %p415 = pneg %p166
      %p416 = pneg %p190
      %p417 = pneg %p187
      %p418 = pneg %p211
      %p419 = pneg %p208
      %p420 = pneg %p232
      %p421 = pneg %p229
      %p422 = pneg %p253
      %p423 = pneg %p250
      %p424 = pneg %p274
      %p425 = pneg %p271
      %p426 = pneg %p295
      %p427 = pneg %p292
      %p428 = pneg %p316
      %p429 = pneg %p313
      %p430 = pneg %p337
      %p431 = pneg %p334
      %p432 = scmp.eq.s32.totalorder %s27, 0
      // Predicated region
      $region73: #{graph_ant_forward.1} parent=71 // pred_check
        %p433 = pneg %p432
      $region74: #{graph_ant_forward.1} parent=71 // pred_check_branch
        %435 = sbr.rel (%p433) target = $region76
      $region75: #{graph_ant_forward.1} parent=71 // pred_region
        %p437 = scmp.lt.u32.totalorder 64, 8
        %p438 = pneg %p437
        // Predicated region
        $region77: #{graph_ant_forward.1} parent=75 // pred_check
          _
        $region78: #{graph_ant_forward.1} parent=75 // pred_check_branch
          %440 = sbr.rel (%p437) target = $region80
        $region79: #{graph_ant_forward.1} parent=75 // pred_region
          %s455 = sand.u32 64, 7
          %p456 = scmp.eq.s32.totalorder %s455, 0
          // Predicated region
          $region92: #{graph_ant_forward.1} parent=79 // pred_check
            %p457 = pneg %p456
          $region93: #{graph_ant_forward.1} parent=79 // pred_check_branch
            %459 = sbr.rel (%p457) target = $region95
          $region94: #{graph_ant_forward.1} parent=79 // pred_region
            loop: start=0, step=1, limit=1
            $region96: #{graph_ant_forward.1} parent=94 // loop_pre_header
              _
            $region97: #{graph_ant_forward.1} parent=94 // loop_header
              %s461 = sphi 0, %s465
              %p462 = scmp.ge.s32.totalorder %s461, 1
              %s466 = sphi %s1, %s1
              %s467 = sphi [#allocation2], [#allocation2]
            $region98: #{graph_ant_forward.1} parent=94 // loop_header_branch
              %464 = sbr.rel (%p462) target = $region102
            $region99: #{graph_ant_forward.1} parent=94 // loop_body
              %v468 = vld [vmem:[%s466] sm:$0xff]
              %469 = vst [vmem:[%s467] sm:$0xff] %v468
              %v470 = vld [vmem:[%s466 + $0x8] sm:$0xff]
              %471 = vst [vmem:[%s467 + $0x8] sm:$0xff] %v470
              %v472 = vld [vmem:[%s466 + $0x10] sm:$0xff]
              %473 = vst [vmem:[%s467 + $0x10] sm:$0xff] %v472
              %v474 = vld [vmem:[%s466 + $0x18] sm:$0xff]
              %475 = vst [vmem:[%s467 + $0x18] sm:$0xff] %v474
              %v476 = vld [vmem:[%s466 + $0x20] sm:$0xff]
              %477 = vst [vmem:[%s467 + $0x20] sm:$0xff] %v476
              %v478 = vld [vmem:[%s466 + $0x28] sm:$0xff]
              %479 = vst [vmem:[%s467 + $0x28] sm:$0xff] %v478
              %v480 = vld [vmem:[%s466 + $0x30] sm:$0xff]
              %481 = vst [vmem:[%s467 + $0x30] sm:$0xff] %v480
              %v482 = vld [vmem:[%s466 + $0x38] sm:$0xff]
              %483 = vst [vmem:[%s467 + $0x38] sm:$0xff] %v482
            $region100: #{graph_ant_forward.1} parent=94 // loop_footer
              %s465 = sadd.s32 1, %s461
            $region101: #{graph_ant_forward.1} parent=94 // loop_footer_branch
              %460 = sbr.rel target = $region97
            $region102: #{graph_ant_forward.1} parent=94 // loop_exit
              _
          $region95: #{graph_ant_forward.1} parent=79 // pred_fallthru
            _
          %p484 = pneg %p456
          // Predicated region
          $region103: #{graph_ant_forward.1} parent=79 // pred_check
            _
          $region104: #{graph_ant_forward.1} parent=79 // pred_check_branch
            %486 = sbr.rel (%p456) target = $region106
          $region105: #{graph_ant_forward.1} parent=79 // pred_region
            %s487 = sand.u32 64, 7
          $region106: #{graph_ant_forward.1} parent=79 // pred_fallthru
            _
        $region80: #{graph_ant_forward.1} parent=75 // pred_fallthru
          _
        // Predicated region
        $region81: #{graph_ant_forward.1} parent=75 // pred_check
          %p441 = pneg %p437
        $region82: #{graph_ant_forward.1} parent=75 // pred_check_branch
          %443 = sbr.rel (%p441) target = $region84
        $region83: #{graph_ant_forward.1} parent=75 // pred_region
          %s444 = sshllo.u32 0, 64
          loop: start=0, step=1, limit=1
          $region85: #{graph_ant_forward.1} parent=83 // loop_pre_header
            _
          $region86: #{graph_ant_forward.1} parent=83 // loop_header
            %s446 = sphi 0, %s450
            %p447 = scmp.ge.s32.totalorder %s446, 1
            %s451 = sphi %s1, %s1
            %s452 = sphi [#allocation2], [#allocation2]
          $region87: #{graph_ant_forward.1} parent=83 // loop_header_branch
            %449 = sbr.rel (%p447) target = $region91
          $region88: #{graph_ant_forward.1} parent=83 // loop_body
            %v453 = vld [vmem:[%s451] sm:%s444]
            %454 = vst [vmem:[%s452] sm:%s444] %v453
          $region89: #{graph_ant_forward.1} parent=83 // loop_footer
            %s450 = sadd.s32 1, %s446
          $region90: #{graph_ant_forward.1} parent=83 // loop_footer_branch
            %445 = sbr.rel target = $region86
          $region91: #{graph_ant_forward.1} parent=83 // loop_exit
            _
        $region84: #{graph_ant_forward.1} parent=75 // pred_fallthru
          _
        // Predicated region
        $region107: #{graph_ant_forward.1} parent=75 // pred_check
          _
        $region108: #{graph_ant_forward.1} parent=75 // pred_check_branch
          %490 = sbr.rel (0) target = $region110
        $region109: #{graph_ant_forward.1} parent=75 // pred_region
          %491 = vsyncadd [#allocation3], 1024
        $region110: #{graph_ant_forward.1} parent=75 // pred_fallthru
          _
        %s492 = smul.u32 4, 16
        %s493 = smul.u32 %s492, 1
        %s494 = sshll.u32 %s493, 4
        %495 = dma.done [#allocation3], %s494
        %v496 = vld [vmem:[#allocation2] sm:$0xff]
        %v497 = vld [vmem:[#allocation2 + $0x8] sm:$0xff]
        %v498 = vld [vmem:[#allocation2 + $0x10] sm:$0xff]
        %v499 = vld [vmem:[#allocation2 + $0x18] sm:$0xff]
        %v500 = vld [vmem:[#allocation2 + $0x20] sm:$0xff]
        %v501 = vld [vmem:[#allocation2 + $0x28] sm:$0xff]
        %v502 = vld [vmem:[#allocation2 + $0x30] sm:$0xff]
        %v503 = vld [vmem:[#allocation2 + $0x38] sm:$0xff]
        %v504 = vunpack.c.l.bf16 %v496
        %v505 = vunpack.c.h.bf16 %v496
        %v506 = vunpack.c.l.bf16 %v497
        %v507 = vunpack.c.h.bf16 %v497
        %v508 = vunpack.c.l.bf16 %v498
        %v509 = vunpack.c.h.bf16 %v498
        %v510 = vunpack.c.l.bf16 %v499
        %v511 = vunpack.c.h.bf16 %v499
        %v512 = vunpack.c.l.bf16 %v500
        %v513 = vunpack.c.h.bf16 %v500
        %v514 = vunpack.c.l.bf16 %v501
        %v515 = vunpack.c.h.bf16 %v501
        %v516 = vunpack.c.l.bf16 %v502
        %v517 = vunpack.c.h.bf16 %v502
        %v518 = vunpack.c.l.bf16 %v503
        %v519 = vunpack.c.h.bf16 %v503
        %v520 = vld [vmem:[%s0] sm:$0xff]
        %v521 = vld [vmem:[%s0 + $0x8] sm:$0xff]
        %v522 = vld [vmem:[%s0 + $0x10] sm:$0xff]
        %v523 = vld [vmem:[%s0 + $0x18] sm:$0xff]
        %v524 = vld [vmem:[%s0 + $0x20] sm:$0xff]
        %v525 = vld [vmem:[%s0 + $0x28] sm:$0xff]
        %v526 = vld [vmem:[%s0 + $0x30] sm:$0xff]
        %v527 = vld [vmem:[%s0 + $0x38] sm:$0xff]
        %v528 = vld [vmem:[%s0 + $0x40] sm:$0xff]
        %v529 = vld [vmem:[%s0 + $0x48] sm:$0xff]
        %v530 = vld [vmem:[%s0 + $0x50] sm:$0xff]
        %v531 = vld [vmem:[%s0 + $0x58] sm:$0xff]
        %v532 = vld [vmem:[%s0 + $0x60] sm:$0xff]
        %v533 = vld [vmem:[%s0 + $0x68] sm:$0xff]
        %v534 = vld [vmem:[%s0 + $0x70] sm:$0xff]
        %v535 = vld [vmem:[%s0 + $0x78] sm:$0xff]
        %v536 = vmul.f32 %v520, 1.1
        %v537 = vmul.f32 %v521, 1.1
        %v538 = vmul.f32 %v522, 1.1
        %v539 = vmul.f32 %v523, 1.1
        %v540 = vmul.f32 %v524, 1.1
        %v541 = vmul.f32 %v525, 1.1
        %v542 = vmul.f32 %v526, 1.1
        %v543 = vmul.f32 %v527, 1.1
        %v544 = vmul.f32 %v528, 1.1
        %v545 = vmul.f32 %v529, 1.1
        %v546 = vmul.f32 %v530, 1.1
        %v547 = vmul.f32 %v531, 1.1
        %v548 = vmul.f32 %v532, 1.1
        %v549 = vmul.f32 %v533, 1.1
        %v550 = vmul.f32 %v534, 1.1
        %v551 = vmul.f32 %v535, 1.1
        %552 = vmatprep.subr.mxu0 0.0
        %553 = vmatpush1.msra.mxu0 %v520
        %554 = vmatprep.subr.mxu0 0.0
        %555 = vmatpush1.msra.mxu0 %v521
        %556 = vmatprep.subr.mxu0 0.0
        %557 = vmatpush1.msra.mxu0 %v522
        %558 = vmatprep.subr.mxu0 0.0
        %559 = vmatpush1.msra.mxu0 %v523
        %560 = vmatprep.subr.mxu0 0.0
        %561 = vmatpush1.msra.mxu0 %v524
        %562 = vmatprep.subr.mxu0 0.0
        %563 = vmatpush1.msra.mxu0 %v525
        %564 = vmatprep.subr.mxu0 0.0
        %565 = vmatpush1.msra.mxu0 %v526
        %566 = vmatprep.subr.mxu0 0.0
        %567 = vmatpush1.msra.mxu0 %v527
        %568 = vmatprep.subr.mxu0 0.0
        %569 = vmatpush1.msra.mxu0 %v528
        %570 = vmatprep.subr.mxu0 0.0
        %571 = vmatpush1.msra.mxu0 %v529
        %572 = vmatprep.subr.mxu0 0.0
        %573 = vmatpush1.msra.mxu0 %v530
        %574 = vmatprep.subr.mxu0 0.0
        %575 = vmatpush1.msra.mxu0 %v531
        %576 = vmatprep.subr.mxu0 0.0
        %577 = vmatpush1.msra.mxu0 %v532
        %578 = vmatprep.subr.mxu0 0.0
        %579 = vmatpush1.msra.mxu0 %v533
        %580 = vmatprep.subr.mxu0 0.0
        %581 = vmatpush1.msra.mxu0 %v534
        %582 = vmatprep.subr.mxu0 0.0
        %583 = vmatpush1.msra.mxu0 %v535
        %584 = vmatprep.subr.mxu0 0.0
        %585 = vmatpush1.msra.mxu0 0.0
        %586 = vmatprep.subr.mxu0 0.0
        %587 = vmatpush1.msra.mxu0 0.0
        %588 = vmatprep.subr.mxu0 0.0
        %589 = vmatpush1.msra.mxu0 0.0
        %590 = vmatprep.subr.mxu0 0.0
        %591 = vmatpush1.msra.mxu0 0.0
        %592 = vmatprep.subr.mxu0 0.0
        %593 = vmatpush1.msra.mxu0 0.0
        %594 = vmatprep.subr.mxu0 0.0
        %595 = vmatpush1.msra.mxu0 0.0
        %596 = vmatprep.subr.mxu0 0.0
        %597 = vmatpush1.msra.mxu0 0.0
        %598 = vmatprep.subr.mxu0 0.0
        %599 = vmatpush1.msra.mxu0 0.0
        %600 = vmatprep.subr.mxu0 0.0
        %601 = vmatpush1.msra.mxu0 0.0
        %602 = vmatprep.subr.mxu0 0.0
        %603 = vmatpush1.msra.mxu0 0.0
        %604 = vmatprep.subr.mxu0 0.0
        %605 = vmatpush1.msra.mxu0 0.0
        %606 = vmatprep.subr.mxu0 0.0
        %607 = vmatpush1.msra.mxu0 0.0
        %608 = vmatprep.subr.mxu0 0.0
        %609 = vmatpush1.msra.mxu0 0.0
        %610 = vmatprep.subr.mxu0 0.0
        %611 = vmatpush1.msra.mxu0 0.0
        %612 = vmatprep.subr.mxu0 0.0
        %613 = vmatpush1.msra.mxu0 0.0
        %614 = vmatprep.subr.mxu0 0.0
        %615 = vmatpush1.msra.mxu0 0.0
        %616 = vmatprep.mubr.f32.mxu0 0.0
        %617 = vmatmul.mubr.f32.gmra.mrb[0].mxu0 %v504
        %v618 = vpop.f32.mrb[0].mxu0
        %v619 = vadd.f32 0.0, %v618
        %v620 = vpop.f32.mrb[0].mxu0
        %621 = vmatprep.mubr.f32.mxu0 0.0
        %622 = vmatmul.mubr.f32.gmra.mrb[0].mxu0 %v505
        %v623 = vpop.f32.mrb[0].mxu0
        %v624 = vadd.f32 0.0, %v623
        %v625 = vpop.f32.mrb[0].mxu0
        %626 = vmatprep.mubr.f32.mxu0 0.0
        %627 = vmatmul.mubr.f32.gmra.mrb[0].mxu0 %v506
        %v628 = vpop.f32.mrb[0].mxu0
        %v629 = vadd.f32 0.0, %v628
        %v630 = vpop.f32.mrb[0].mxu0
        %631 = vmatprep.mubr.f32.mxu0 0.0
        %632 = vmatmul.mubr.f32.gmra.mrb[0].mxu0 %v507
        %v633 = vpop.f32.mrb[0].mxu0
        %v634 = vadd.f32 0.0, %v633
        %v635 = vpop.f32.mrb[0].mxu0
        %636 = vmatprep.mubr.f32.mxu0 0.0
        %637 = vmatmul.mubr.f32.gmra.mrb[0].mxu0 %v508
        %v638 = vpop.f32.mrb[0].mxu0
        %v639 = vadd.f32 0.0, %v638
        %v640 = vpop.f32.mrb[0].mxu0
        %641 = vmatprep.mubr.f32.mxu0 0.0
        %642 = vmatmul.mubr.f32.gmra.mrb[0].mxu0 %v509
        %v643 = vpop.f32.mrb[0].mxu0
        %v644 = vadd.f32 0.0, %v643
        %v645 = vpop.f32.mrb[0].mxu0
        %646 = vmatprep.mubr.f32.mxu0 0.0
        %647 = vmatmul.mubr.f32.gmra.mrb[0].mxu0 %v510
        %v648 = vpop.f32.mrb[0].mxu0
        %v649 = vadd.f32 0.0, %v648
        %v650 = vpop.f32.mrb[0].mxu0
        %651 = vmatprep.mubr.f32.mxu0 0.0
        %652 = vmatmul.mubr.f32.gmra.mrb[0].mxu0 %v511
        %v653 = vpop.f32.mrb[0].mxu0
        %v654 = vadd.f32 0.0, %v653
        %v655 = vpop.f32.mrb[0].mxu0
        %656 = vmatprep.mubr.f32.mxu0 0.0
        %657 = vmatmul.mubr.f32.gmra.mrb[0].mxu0 %v512
        %v658 = vpop.f32.mrb[0].mxu0
        %v659 = vadd.f32 0.0, %v658
        %v660 = vpop.f32.mrb[0].mxu0
        %661 = vmatprep.mubr.f32.mxu0 0.0
        %662 = vmatmul.mubr.f32.gmra.mrb[0].mxu0 %v513
        %v663 = vpop.f32.mrb[0].mxu0
        %v664 = vadd.f32 0.0, %v663
        %v665 = vpop.f32.mrb[0].mxu0
        %666 = vmatprep.mubr.f32.mxu0 0.0
        %667 = vmatmul.mubr.f32.gmra.mrb[0].mxu0 %v514
        %v668 = vpop.f32.mrb[0].mxu0
        %v669 = vadd.f32 0.0, %v668
        %v670 = vpop.f32.mrb[0].mxu0
        %671 = vmatprep.mubr.f32.mxu0 0.0
        %672 = vmatmul.mubr.f32.gmra.mrb[0].mxu0 %v515
        %v673 = vpop.f32.mrb[0].mxu0
        %v674 = vadd.f32 0.0, %v673
        %v675 = vpop.f32.mrb[0].mxu0
        %676 = vmatprep.mubr.f32.mxu0 0.0
        %677 = vmatmul.mubr.f32.gmra.mrb[0].mxu0 %v516
        %v678 = vpop.f32.mrb[0].mxu0
        %v679 = vadd.f32 0.0, %v678
        %v680 = vpop.f32.mrb[0].mxu0
        %681 = vmatprep.mubr.f32.mxu0 0.0
        %682 = vmatmul.mubr.f32.gmra.mrb[0].mxu0 %v517
        %v683 = vpop.f32.mrb[0].mxu0
        %v684 = vadd.f32 0.0, %v683
        %v685 = vpop.f32.mrb[0].mxu0
        %686 = vmatprep.mubr.f32.mxu0 0.0
        %687 = vmatmul.mubr.f32.gmra.mrb[0].mxu0 %v518
        %v688 = vpop.f32.mrb[0].mxu0
        %v689 = vadd.f32 0.0, %v688
        %v690 = vpop.f32.mrb[0].mxu0
        %691 = vmatprep.mubr.f32.mxu0 0.0
        %692 = vmatmul.mubr.f32.gmra.mrb[0].mxu0 %v519
        %v693 = vpop.f32.mrb[0].mxu0
        %v694 = vadd.f32 0.0, %v693
        %v695 = vpop.f32.mrb[0].mxu0
        %696 = vdwg.mxu0
        %v697 = vadd.f32 %v536, %v619
        %v698 = vadd.f32 %v537, %v624
        %v699 = vadd.f32 %v538, %v629
        %v700 = vadd.f32 %v539, %v634
        %v701 = vadd.f32 %v540, %v639
        %v702 = vadd.f32 %v541, %v644
        %v703 = vadd.f32 %v542, %v649
        %v704 = vadd.f32 %v543, %v654
        %v705 = vadd.f32 %v544, %v659
        %v706 = vadd.f32 %v545, %v664
        %v707 = vadd.f32 %v546, %v669
        %v708 = vadd.f32 %v547, %v674
        %v709 = vadd.f32 %v548, %v679
        %v710 = vadd.f32 %v549, %v684
        %v711 = vadd.f32 %v550, %v689
        %v712 = vadd.f32 %v551, %v694
        %v713 = vld [vmem:[%s3] sm:$0xff]
        %v714 = vld [vmem:[%s3 + $0x8] sm:$0xff]
        %v715 = vld [vmem:[%s3 + $0x10] sm:$0xff]
        %v716 = vld [vmem:[%s3 + $0x18] sm:$0xff]
        %v717 = vld [vmem:[%s3 + $0x20] sm:$0xff]
        %v718 = vld [vmem:[%s3 + $0x28] sm:$0xff]
        %v719 = vld [vmem:[%s3 + $0x30] sm:$0xff]
        %v720 = vld [vmem:[%s3 + $0x38] sm:$0xff]
        %v721 = vld [vmem:[%s3 + $0x40] sm:$0xff]
        %v722 = vld [vmem:[%s3 + $0x48] sm:$0xff]
        %v723 = vld [vmem:[%s3 + $0x50] sm:$0xff]
        %v724 = vld [vmem:[%s3 + $0x58] sm:$0xff]
        %v725 = vld [vmem:[%s3 + $0x60] sm:$0xff]
        %v726 = vld [vmem:[%s3 + $0x68] sm:$0xff]
        %v727 = vld [vmem:[%s3 + $0x70] sm:$0xff]
        %v728 = vld [vmem:[%s3 + $0x78] sm:$0xff]
        %v729 = vld [vmem:[%s4] sm:$0x1]
        %v731 = vlaneseq
        %v732 = vshrl.u32 %v731, 7
        %v733 = vsub.s32 0, %v732
        %v734 = vrot.slane %v729, %v733
        %736 = vmatprep.subr.mxu0 0.0
        %737 = vmatpush1.msra.mxu0 %v713
        %738 = vmatprep.subr.mxu0 0.0
        %739 = vmatpush1.msra.mxu0 %v714
        %740 = vmatprep.subr.mxu0 0.0
        %741 = vmatpush1.msra.mxu0 %v715
        %742 = vmatprep.subr.mxu0 0.0
        %743 = vmatpush1.msra.mxu0 %v716
        %744 = vmatprep.subr.mxu0 0.0
        %745 = vmatpush1.msra.mxu0 %v717
        %746 = vmatprep.subr.mxu0 0.0
        %747 = vmatpush1.msra.mxu0 %v718
        %748 = vmatprep.subr.mxu0 0.0
        %749 = vmatpush1.msra.mxu0 %v719
        %750 = vmatprep.subr.mxu0 0.0
        %751 = vmatpush1.msra.mxu0 %v720
        %752 = vmatprep.subr.mxu0 0.0
        %753 = vmatpush1.msra.mxu0 %v721
        %754 = vmatprep.subr.mxu0 0.0
        %755 = vmatpush1.msra.mxu0 %v722
        %756 = vmatprep.subr.mxu0 0.0
        %757 = vmatpush1.msra.mxu0 %v723
        %758 = vmatprep.subr.mxu0 0.0
        %759 = vmatpush1.msra.mxu0 %v724
        %760 = vmatprep.subr.mxu0 0.0
        %761 = vmatpush1.msra.mxu0 %v725
        %762 = vmatprep.subr.mxu0 0.0
        %763 = vmatpush1.msra.mxu0 %v726
        %764 = vmatprep.subr.mxu0 0.0
        %765 = vmatpush1.msra.mxu0 %v727
        %766 = vmatprep.subr.mxu0 0.0
        %767 = vmatpush1.msra.mxu0 %v728
        %768 = vmatprep.subr.mxu0 0.0
        %769 = vmatpush1.msra.mxu0 0.0
        %770 = vmatprep.subr.mxu0 0.0
        %771 = vmatpush1.msra.mxu0 0.0
        %772 = vmatprep.subr.mxu0 0.0
        %773 = vmatpush1.msra.mxu0 0.0
        %774 = vmatprep.subr.mxu0 0.0
        %775 = vmatpush1.msra.mxu0 0.0
        %776 = vmatprep.subr.mxu0 0.0
        %777 = vmatpush1.msra.mxu0 0.0
        %778 = vmatprep.subr.mxu0 0.0
        %779 = vmatpush1.msra.mxu0 0.0
        %780 = vmatprep.subr.mxu0 0.0
        %781 = vmatpush1.msra.mxu0 0.0
        %782 = vmatprep.subr.mxu0 0.0
        %783 = vmatpush1.msra.mxu0 0.0
        %784 = vmatprep.subr.mxu0 0.0
        %785 = vmatpush1.msra.mxu0 0.0
        %786 = vmatprep.subr.mxu0 0.0
        %787 = vmatpush1.msra.mxu0 0.0
        %788 = vmatprep.subr.mxu0 0.0
        %789 = vmatpush1.msra.mxu0 0.0
        %790 = vmatprep.subr.mxu0 0.0
        %791 = vmatpush1.msra.mxu0 0.0
        %792 = vmatprep.subr.mxu0 0.0
        %793 = vmatpush1.msra.mxu0 0.0
        %794 = vmatprep.subr.mxu0 0.0
        %795 = vmatpush1.msra.mxu0 0.0
        %796 = vmatprep.subr.mxu0 0.0
        %797 = vmatpush1.msra.mxu0 0.0
        %798 = vmatprep.subr.mxu0 0.0
        %799 = vmatpush1.msra.mxu0 0.0
        %800 = vmatprep.mubr.f32.mxu0 0.0
        %801 = vmatmul.mubr.f32.gmra.mrb[0].mxu0 %v697
        %v802 = vpop.f32.mrb[0].mxu0
        %v803 = vadd.f32 %v734, %v802
        %v804 = vpop.f32.mrb[0].mxu0
        %805 = vmatprep.mubr.f32.mxu0 0.0
        %806 = vmatmul.mubr.f32.gmra.mrb[0].mxu0 %v698
        %v807 = vpop.f32.mrb[0].mxu0
        %v808 = vadd.f32 %v734, %v807
        %v809 = vpop.f32.mrb[0].mxu0
        %810 = vmatprep.mubr.f32.mxu0 0.0
        %811 = vmatmul.mubr.f32.gmra.mrb[0].mxu0 %v699
        %v812 = vpop.f32.mrb[0].mxu0
        %v813 = vadd.f32 %v734, %v812
        %v814 = vpop.f32.mrb[0].mxu0
        %815 = vmatprep.mubr.f32.mxu0 0.0
        %816 = vmatmul.mubr.f32.gmra.mrb[0].mxu0 %v700
        %v817 = vpop.f32.mrb[0].mxu0
        %v818 = vadd.f32 %v734, %v817
        %v819 = vpop.f32.mrb[0].mxu0
        %820 = vmatprep.mubr.f32.mxu0 0.0
        %821 = vmatmul.mubr.f32.gmra.mrb[0].mxu0 %v701
        %v822 = vpop.f32.mrb[0].mxu0
        %v823 = vadd.f32 %v734, %v822
        %v824 = vpop.f32.mrb[0].mxu0
        %825 = vmatprep.mubr.f32.mxu0 0.0
        %826 = vmatmul.mubr.f32.gmra.mrb[0].mxu0 %v702
        %v827 = vpop.f32.mrb[0].mxu0
        %v828 = vadd.f32 %v734, %v827
        %v829 = vpop.f32.mrb[0].mxu0
        %830 = vmatprep.mubr.f32.mxu0 0.0
        %831 = vmatmul.mubr.f32.gmra.mrb[0].mxu0 %v703
        %v832 = vpop.f32.mrb[0].mxu0
        %v833 = vadd.f32 %v734, %v832
        %v834 = vpop.f32.mrb[0].mxu0
        %835 = vmatprep.mubr.f32.mxu0 0.0
        %836 = vmatmul.mubr.f32.gmra.mrb[0].mxu0 %v704
        %v837 = vpop.f32.mrb[0].mxu0
        %v838 = vadd.f32 %v734, %v837
        %v839 = vpop.f32.mrb[0].mxu0
        %840 = vmatprep.mubr.f32.mxu0 0.0
        %841 = vmatmul.mubr.f32.gmra.mrb[0].mxu0 %v705
        %v842 = vpop.f32.mrb[0].mxu0
        %v843 = vadd.f32 %v734, %v842
        %v844 = vpop.f32.mrb[0].mxu0
        %845 = vmatprep.mubr.f32.mxu0 0.0
        %846 = vmatmul.mubr.f32.gmra.mrb[0].mxu0 %v706
        %v847 = vpop.f32.mrb[0].mxu0
        %v848 = vadd.f32 %v734, %v847
        %v849 = vpop.f32.mrb[0].mxu0
        %850 = vmatprep.mubr.f32.mxu0 0.0
        %851 = vmatmul.mubr.f32.gmra.mrb[0].mxu0 %v707
        %v852 = vpop.f32.mrb[0].mxu0
        %v853 = vadd.f32 %v734, %v852
        %v854 = vpop.f32.mrb[0].mxu0
        %855 = vmatprep.mubr.f32.mxu0 0.0
        %856 = vmatmul.mubr.f32.gmra.mrb[0].mxu0 %v708
        %v857 = vpop.f32.mrb[0].mxu0
        %v858 = vadd.f32 %v734, %v857
        %v859 = vpop.f32.mrb[0].mxu0
        %860 = vmatprep.mubr.f32.mxu0 0.0
        %861 = vmatmul.mubr.f32.gmra.mrb[0].mxu0 %v709
        %v862 = vpop.f32.mrb[0].mxu0
        %v863 = vadd.f32 %v734, %v862
        %v864 = vpop.f32.mrb[0].mxu0
        %865 = vmatprep.mubr.f32.mxu0 0.0
        %866 = vmatmul.mubr.f32.gmra.mrb[0].mxu0 %v710
        %v867 = vpop.f32.mrb[0].mxu0
        %v868 = vadd.f32 %v734, %v867
        %v869 = vpop.f32.mrb[0].mxu0
        %870 = vmatprep.mubr.f32.mxu0 0.0
        %871 = vmatmul.mubr.f32.gmra.mrb[0].mxu0 %v711
        %v872 = vpop.f32.mrb[0].mxu0
        %v873 = vadd.f32 %v734, %v872
        %v874 = vpop.f32.mrb[0].mxu0
        %875 = vmatprep.mubr.f32.mxu0 0.0
        %876 = vmatmul.mubr.f32.gmra.mrb[0].mxu0 %v712
        %v877 = vpop.f32.mrb[0].mxu0
        %v878 = vadd.f32 %v734, %v877
        %v879 = vpop.f32.mrb[0].mxu0
        %880 = vdwg.mxu0
        %v881 = vmax.f32 %v803, 0.0
        %v882 = vmax.f32 %v808, 0.0
        %v883 = vmax.f32 %v813, 0.0
        %v884 = vmax.f32 %v818, 0.0
        %v885 = vmax.f32 %v823, 0.0
        %v886 = vmax.f32 %v828, 0.0
        %v887 = vmax.f32 %v833, 0.0
        %v888 = vmax.f32 %v838, 0.0
        %v889 = vmax.f32 %v843, 0.0
        %v890 = vmax.f32 %v848, 0.0
        %v891 = vmax.f32 %v853, 0.0
        %v892 = vmax.f32 %v858, 0.0
        %v893 = vmax.f32 %v863, 0.0
        %v894 = vmax.f32 %v868, 0.0
        %v895 = vmax.f32 %v873, 0.0
        %v896 = vmax.f32 %v878, 0.0
        %v897 = vld [vmem:[%s5] sm:$0xff]
        %v898 = vld [vmem:[%s5 + $0x8] sm:$0xff]
        %v899 = vld [vmem:[%s5 + $0x10] sm:$0xff]
        %v900 = vld [vmem:[%s5 + $0x18] sm:$0xff]
        %v901 = vld [vmem:[%s5 + $0x20] sm:$0xff]
        %v902 = vld [vmem:[%s5 + $0x28] sm:$0xff]
        %v903 = vld [vmem:[%s5 + $0x30] sm:$0xff]
        %v904 = vld [vmem:[%s5 + $0x38] sm:$0xff]
        %v905 = vld [vmem:[%s5 + $0x40] sm:$0xff]
        %v906 = vld [vmem:[%s5 + $0x48] sm:$0xff]
        %v907 = vld [vmem:[%s5 + $0x50] sm:$0xff]
        %v908 = vld [vmem:[%s5 + $0x58] sm:$0xff]
        %v909 = vld [vmem:[%s5 + $0x60] sm:$0xff]
        %v910 = vld [vmem:[%s5 + $0x68] sm:$0xff]
        %v911 = vld [vmem:[%s5 + $0x70] sm:$0xff]
        %v912 = vld [vmem:[%s5 + $0x78] sm:$0xff]
        %v913 = vld [vmem:[%s6] sm:$0x1]
        %v915 = vlaneseq
        %v916 = vshrl.u32 %v915, 7
        %v917 = vsub.s32 0, %v916
        %v918 = vrot.slane %v913, %v917
        %920 = vmatprep.subr.mxu0 0.0
        %921 = vmatpush1.msra.mxu0 %v897
        %922 = vmatprep.subr.mxu0 0.0
        %923 = vmatpush1.msra.mxu0 %v898
        %924 = vmatprep.subr.mxu0 0.0
        %925 = vmatpush1.msra.mxu0 %v899
        %926 = vmatprep.subr.mxu0 0.0
        %927 = vmatpush1.msra.mxu0 %v900
        %928 = vmatprep.subr.mxu0 0.0
        %929 = vmatpush1.msra.mxu0 %v901
        %930 = vmatprep.subr.mxu0 0.0
        %931 = vmatpush1.msra.mxu0 %v902
        %932 = vmatprep.subr.mxu0 0.0
        %933 = vmatpush1.msra.mxu0 %v903
        %934 = vmatprep.subr.mxu0 0.0
        %935 = vmatpush1.msra.mxu0 %v904
        %936 = vmatprep.subr.mxu0 0.0
        %937 = vmatpush1.msra.mxu0 %v905
        %938 = vmatprep.subr.mxu0 0.0
        %939 = vmatpush1.msra.mxu0 %v906
        %940 = vmatprep.subr.mxu0 0.0
        %941 = vmatpush1.msra.mxu0 %v907
        %942 = vmatprep.subr.mxu0 0.0
        %943 = vmatpush1.msra.mxu0 %v908
        %944 = vmatprep.subr.mxu0 0.0
        %945 = vmatpush1.msra.mxu0 %v909
        %946 = vmatprep.subr.mxu0 0.0
        %947 = vmatpush1.msra.mxu0 %v910
        %948 = vmatprep.subr.mxu0 0.0
        %949 = vmatpush1.msra.mxu0 %v911
        %950 = vmatprep.subr.mxu0 0.0
        %951 = vmatpush1.msra.mxu0 %v912
        %952 = vmatprep.subr.mxu0 0.0
        %953 = vmatpush1.msra.mxu0 0.0
        %954 = vmatprep.subr.mxu0 0.0
        %955 = vmatpush1.msra.mxu0 0.0
        %956 = vmatprep.subr.mxu0 0.0
        %957 = vmatpush1.msra.mxu0 0.0
        %958 = vmatprep.subr.mxu0 0.0
        %959 = vmatpush1.msra.mxu0 0.0
        %960 = vmatprep.subr.mxu0 0.0
        %961 = vmatpush1.msra.mxu0 0.0
        %962 = vmatprep.subr.mxu0 0.0
        %963 = vmatpush1.msra.mxu0 0.0
        %964 = vmatprep.subr.mxu0 0.0
        %965 = vmatpush1.msra.mxu0 0.0
        %966 = vmatprep.subr.mxu0 0.0
        %967 = vmatpush1.msra.mxu0 0.0
        %968 = vmatprep.subr.mxu0 0.0
        %969 = vmatpush1.msra.mxu0 0.0
        %970 = vmatprep.subr.mxu0 0.0
        %971 = vmatpush1.msra.mxu0 0.0
        %972 = vmatprep.subr.mxu0 0.0
        %973 = vmatpush1.msra.mxu0 0.0
        %974 = vmatprep.subr.mxu0 0.0
        %975 = vmatpush1.msra.mxu0 0.0
        %976 = vmatprep.subr.mxu0 0.0
        %977 = vmatpush1.msra.mxu0 0.0
        %978 = vmatprep.subr.mxu0 0.0
        %979 = vmatpush1.msra.mxu0 0.0
        %980 = vmatprep.subr.mxu0 0.0
        %981 = vmatpush1.msra.mxu0 0.0
        %982 = vmatprep.subr.mxu0 0.0
        %983 = vmatpush1.msra.mxu0 0.0
        %984 = vmatprep.mubr.f32.mxu0 0.0
        %985 = vmatmul.mubr.f32.gmra.mrb[0].mxu0 %v881
        %v986 = vpop.f32.mrb[0].mxu0
        %v987 = vadd.f32 %v918, %v986
        %v988 = vpop.f32.mrb[0].mxu0
        %989 = vmatprep.mubr.f32.mxu0 0.0
        %990 = vmatmul.mubr.f32.gmra.mrb[0].mxu0 %v882
        %v991 = vpop.f32.mrb[0].mxu0
        %v992 = vadd.f32 %v918, %v991
        %v993 = vpop.f32.mrb[0].mxu0
        %994 = vmatprep.mubr.f32.mxu0 0.0
        %995 = vmatmul.mubr.f32.gmra.mrb[0].mxu0 %v883
        %v996 = vpop.f32.mrb[0].mxu0
        %v997 = vadd.f32 %v918, %v996
        %v998 = vpop.f32.mrb[0].mxu0
        %999 = vmatprep.mubr.f32.mxu0 0.0
        %1000 = vmatmul.mubr.f32.gmra.mrb[0].mxu0 %v884
        %v1001 = vpop.f32.mrb[0].mxu0
        %v1002 = vadd.f32 %v918, %v1001
        %v1003 = vpop.f32.mrb[0].mxu0
        %1004 = vmatprep.mubr.f32.mxu0 0.0
        %1005 = vmatmul.mubr.f32.gmra.mrb[0].mxu0 %v885
        %v1006 = vpop.f32.mrb[0].mxu0
        %v1007 = vadd.f32 %v918, %v1006
        %v1008 = vpop.f32.mrb[0].mxu0
        %1009 = vmatprep.mubr.f32.mxu0 0.0
        %1010 = vmatmul.mubr.f32.gmra.mrb[0].mxu0 %v886
        %v1011 = vpop.f32.mrb[0].mxu0
        %v1012 = vadd.f32 %v918, %v1011
        %v1013 = vpop.f32.mrb[0].mxu0
        %1014 = vmatprep.mubr.f32.mxu0 0.0
        %1015 = vmatmul.mubr.f32.gmra.mrb[0].mxu0 %v887
        %v1016 = vpop.f32.mrb[0].mxu0
        %v1017 = vadd.f32 %v918, %v1016
        %v1018 = vpop.f32.mrb[0].mxu0
        %1019 = vmatprep.mubr.f32.mxu0 0.0
        %1020 = vmatmul.mubr.f32.gmra.mrb[0].mxu0 %v888
        %v1021 = vpop.f32.mrb[0].mxu0
        %v1022 = vadd.f32 %v918, %v1021
        %v1023 = vpop.f32.mrb[0].mxu0
        %1024 = vmatprep.mubr.f32.mxu0 0.0
        %1025 = vmatmul.mubr.f32.gmra.mrb[0].mxu0 %v889
        %v1026 = vpop.f32.mrb[0].mxu0
        %v1027 = vadd.f32 %v918, %v1026
        %v1028 = vpop.f32.mrb[0].mxu0
        %1029 = vmatprep.mubr.f32.mxu0 0.0
        %1030 = vmatmul.mubr.f32.gmra.mrb[0].mxu0 %v890
        %v1031 = vpop.f32.mrb[0].mxu0
        %v1032 = vadd.f32 %v918, %v1031
        %v1033 = vpop.f32.mrb[0].mxu0
        %1034 = vmatprep.mubr.f32.mxu0 0.0
        %1035 = vmatmul.mubr.f32.gmra.mrb[0].mxu0 %v891
        %v1036 = vpop.f32.mrb[0].mxu0
        %v1037 = vadd.f32 %v918, %v1036
        %v1038 = vpop.f32.mrb[0].mxu0
        %1039 = vmatprep.mubr.f32.mxu0 0.0
        %1040 = vmatmul.mubr.f32.gmra.mrb[0].mxu0 %v892
        %v1041 = vpop.f32.mrb[0].mxu0
        %v1042 = vadd.f32 %v918, %v1041
        %v1043 = vpop.f32.mrb[0].mxu0
        %1044 = vmatprep.mubr.f32.mxu0 0.0
        %1045 = vmatmul.mubr.f32.gmra.mrb[0].mxu0 %v893
        %v1046 = vpop.f32.mrb[0].mxu0
        %v1047 = vadd.f32 %v918, %v1046
        %v1048 = vpop.f32.mrb[0].mxu0
        %1049 = vmatprep.mubr.f32.mxu0 0.0
        %1050 = vmatmul.mubr.f32.gmra.mrb[0].mxu0 %v894
        %v1051 = vpop.f32.mrb[0].mxu0
        %v1052 = vadd.f32 %v918, %v1051
        %v1053 = vpop.f32.mrb[0].mxu0
        %1054 = vmatprep.mubr.f32.mxu0 0.0
        %1055 = vmatmul.mubr.f32.gmra.mrb[0].mxu0 %v895
        %v1056 = vpop.f32.mrb[0].mxu0
        %v1057 = vadd.f32 %v918, %v1056
        %v1058 = vpop.f32.mrb[0].mxu0
        %1059 = vmatprep.mubr.f32.mxu0 0.0
        %1060 = vmatmul.mubr.f32.gmra.mrb[0].mxu0 %v896
        %v1061 = vpop.f32.mrb[0].mxu0
        %v1062 = vadd.f32 %v918, %v1061
        %v1063 = vpop.f32.mrb[0].mxu0
        %1064 = vdwg.mxu0
        %1065 = vst [vmem:[#allocation4] sm:$0xff] %v987
        %1066 = vst [vmem:[#allocation4 + $0x8] sm:$0xff] %v992
        %1067 = vst [vmem:[#allocation4 + $0x10] sm:$0xff] %v997
        %1068 = vst [vmem:[#allocation4 + $0x18] sm:$0xff] %v1002
        %1069 = vst [vmem:[#allocation4 + $0x20] sm:$0xff] %v1007
        %1070 = vst [vmem:[#allocation4 + $0x28] sm:$0xff] %v1012
        %1071 = vst [vmem:[#allocation4 + $0x30] sm:$0xff] %v1017
        %1072 = vst [vmem:[#allocation4 + $0x38] sm:$0xff] %v1022
        %1073 = vst [vmem:[#allocation4 + $0x40] sm:$0xff] %v1027
        %1074 = vst [vmem:[#allocation4 + $0x48] sm:$0xff] %v1032
        %1075 = vst [vmem:[#allocation4 + $0x50] sm:$0xff] %v1037
        %1076 = vst [vmem:[#allocation4 + $0x58] sm:$0xff] %v1042
        %1077 = vst [vmem:[#allocation4 + $0x60] sm:$0xff] %v1047
        %1078 = vst [vmem:[#allocation4 + $0x68] sm:$0xff] %v1052
        %1079 = vst [vmem:[#allocation4 + $0x70] sm:$0xff] %v1057
        %1080 = vst [vmem:[#allocation4 + $0x78] sm:$0xff] %v1062
        %v1081 = vmul.f32 %v987, 1.2
        %v1082 = vmul.f32 %v992, 1.2
        %v1083 = vmul.f32 %v997, 1.2
        %v1084 = vmul.f32 %v1002, 1.2
        %v1085 = vmul.f32 %v1007, 1.2
        %v1086 = vmul.f32 %v1012, 1.2
        %v1087 = vmul.f32 %v1017, 1.2
        %v1088 = vmul.f32 %v1022, 1.2
        %v1089 = vmul.f32 %v1027, 1.2
        %v1090 = vmul.f32 %v1032, 1.2
        %v1091 = vmul.f32 %v1037, 1.2
        %v1092 = vmul.f32 %v1042, 1.2
        %v1093 = vmul.f32 %v1047, 1.2
        %v1094 = vmul.f32 %v1052, 1.2
        %v1095 = vmul.f32 %v1057, 1.2
        %v1096 = vmul.f32 %v1062, 1.2
        %1097 = vmatprep.subr.mxu0 0.0
        %1098 = vmatpush1.msra.mxu0 %v987
        %1099 = vmatprep.subr.mxu0 0.0
        %1100 = vmatpush1.msra.mxu0 %v992
        %1101 = vmatprep.subr.mxu0 0.0
        %1102 = vmatpush1.msra.mxu0 %v997
        %1103 = vmatprep.subr.mxu0 0.0
        %1104 = vmatpush1.msra.mxu0 %v1002
        %1105 = vmatprep.subr.mxu0 0.0
        %1106 = vmatpush1.msra.mxu0 %v1007
        %1107 = vmatprep.subr.mxu0 0.0
        %1108 = vmatpush1.msra.mxu0 %v1012
        %1109 = vmatprep.subr.mxu0 0.0
        %1110 = vmatpush1.msra.mxu0 %v1017
        %1111 = vmatprep.subr.mxu0 0.0
        %1112 = vmatpush1.msra.mxu0 %v1022
        %1113 = vmatprep.subr.mxu0 0.0
        %1114 = vmatpush1.msra.mxu0 %v1027
        %1115 = vmatprep.subr.mxu0 0.0
        %1116 = vmatpush1.msra.mxu0 %v1032
        %1117 = vmatprep.subr.mxu0 0.0
        %1118 = vmatpush1.msra.mxu0 %v1037
        %1119 = vmatprep.subr.mxu0 0.0
        %1120 = vmatpush1.msra.mxu0 %v1042
        %1121 = vmatprep.subr.mxu0 0.0
        %1122 = vmatpush1.msra.mxu0 %v1047
        %1123 = vmatprep.subr.mxu0 0.0
        %1124 = vmatpush1.msra.mxu0 %v1052
        %1125 = vmatprep.subr.mxu0 0.0
        %1126 = vmatpush1.msra.mxu0 %v1057
        %1127 = vmatprep.subr.mxu0 0.0
        %1128 = vmatpush1.msra.mxu0 %v1062
        %1129 = vmatprep.subr.mxu0 0.0
        %1130 = vmatpush1.msra.mxu0 0.0
        %1131 = vmatprep.subr.mxu0 0.0
        %1132 = vmatpush1.msra.mxu0 0.0
        %1133 = vmatprep.subr.mxu0 0.0
        %1134 = vmatpush1.msra.mxu0 0.0
        %1135 = vmatprep.subr.mxu0 0.0
        %1136 = vmatpush1.msra.mxu0 0.0
        %1137 = vmatprep.subr.mxu0 0.0
        %1138 = vmatpush1.msra.mxu0 0.0
        %1139 = vmatprep.subr.mxu0 0.0
        %1140 = vmatpush1.msra.mxu0 0.0
        %1141 = vmatprep.subr.mxu0 0.0
        %1142 = vmatpush1.msra.mxu0 0.0
        %1143 = vmatprep.subr.mxu0 0.0
        %1144 = vmatpush1.msra.mxu0 0.0
        %1145 = vmatprep.subr.mxu0 0.0
        %1146 = vmatpush1.msra.mxu0 0.0
        %1147 = vmatprep.subr.mxu0 0.0
        %1148 = vmatpush1.msra.mxu0 0.0
        %1149 = vmatprep.subr.mxu0 0.0
        %1150 = vmatpush1.msra.mxu0 0.0
        %1151 = vmatprep.subr.mxu0 0.0
        %1152 = vmatpush1.msra.mxu0 0.0
        %1153 = vmatprep.subr.mxu0 0.0
        %1154 = vmatpush1.msra.mxu0 0.0
        %1155 = vmatprep.subr.mxu0 0.0
        %1156 = vmatpush1.msra.mxu0 0.0
        %1157 = vmatprep.subr.mxu0 0.0
        %1158 = vmatpush1.msra.mxu0 0.0
        %1159 = vmatprep.subr.mxu0 0.0
        %1160 = vmatpush1.msra.mxu0 0.0
        %1161 = vmatprep.mubr.f32.mxu0 0.0
        %1162 = vmatmul.mubr.f32.gmra.mrb[0].mxu0 %v504
        %v1163 = vpop.f32.mrb[0].mxu0
        %v1164 = vadd.f32 0.0, %v1163
        %v1165 = vpop.f32.mrb[0].mxu0
        %1166 = vmatprep.mubr.f32.mxu0 0.0
        %1167 = vmatmul.mubr.f32.gmra.mrb[0].mxu0 %v505
        %v1168 = vpop.f32.mrb[0].mxu0
        %v1169 = vadd.f32 0.0, %v1168
        %v1170 = vpop.f32.mrb[0].mxu0
        %1171 = vmatprep.mubr.f32.mxu0 0.0
        %1172 = vmatmul.mubr.f32.gmra.mrb[0].mxu0 %v506
        %v1173 = vpop.f32.mrb[0].mxu0
        %v1174 = vadd.f32 0.0, %v1173
        %v1175 = vpop.f32.mrb[0].mxu0
        %1176 = vmatprep.mubr.f32.mxu0 0.0
        %1177 = vmatmul.mubr.f32.gmra.mrb[0].mxu0 %v507
        %v1178 = vpop.f32.mrb[0].mxu0
        %v1179 = vadd.f32 0.0, %v1178
        %v1180 = vpop.f32.mrb[0].mxu0
        %1181 = vmatprep.mubr.f32.mxu0 0.0
        %1182 = vmatmul.mubr.f32.gmra.mrb[0].mxu0 %v508
        %v1183 = vpop.f32.mrb[0].mxu0
        %v1184 = vadd.f32 0.0, %v1183
        %v1185 = vpop.f32.mrb[0].mxu0
        %1186 = vmatprep.mubr.f32.mxu0 0.0
        %1187 = vmatmul.mubr.f32.gmra.mrb[0].mxu0 %v509
        %v1188 = vpop.f32.mrb[0].mxu0
        %v1189 = vadd.f32 0.0, %v1188
        %v1190 = vpop.f32.mrb[0].mxu0
        %1191 = vmatprep.mubr.f32.mxu0 0.0
        %1192 = vmatmul.mubr.f32.gmra.mrb[0].mxu0 %v510
        %v1193 = vpop.f32.mrb[0].mxu0
        %v1194 = vadd.f32 0.0, %v1193
        %v1195 = vpop.f32.mrb[0].mxu0
        %1196 = vmatprep.mubr.f32.mxu0 0.0
        %1197 = vmatmul.mubr.f32.gmra.mrb[0].mxu0 %v511
        %v1198 = vpop.f32.mrb[0].mxu0
        %v1199 = vadd.f32 0.0, %v1198
        %v1200 = vpop.f32.mrb[0].mxu0
        %1201 = vmatprep.mubr.f32.mxu0 0.0
        %1202 = vmatmul.mubr.f32.gmra.mrb[0].mxu0 %v512
        %v1203 = vpop.f32.mrb[0].mxu0
        %v1204 = vadd.f32 0.0, %v1203
        %v1205 = vpop.f32.mrb[0].mxu0
        %1206 = vmatprep.mubr.f32.mxu0 0.0
        %1207 = vmatmul.mubr.f32.gmra.mrb[0].mxu0 %v513
        %v1208 = vpop.f32.mrb[0].mxu0
        %v1209 = vadd.f32 0.0, %v1208
        %v1210 = vpop.f32.mrb[0].mxu0
        %1211 = vmatprep.mubr.f32.mxu0 0.0
        %1212 = vmatmul.mubr.f32.gmra.mrb[0].mxu0 %v514
        %v1213 = vpop.f32.mrb[0].mxu0
        %v1214 = vadd.f32 0.0, %v1213
        %v1215 = vpop.f32.mrb[0].mxu0
        %1216 = vmatprep.mubr.f32.mxu0 0.0
        %1217 = vmatmul.mubr.f32.gmra.mrb[0].mxu0 %v515
        %v1218 = vpop.f32.mrb[0].mxu0
        %v1219 = vadd.f32 0.0, %v1218
        %v1220 = vpop.f32.mrb[0].mxu0
        %1221 = vmatprep.mubr.f32.mxu0 0.0
        %1222 = vmatmul.mubr.f32.gmra.mrb[0].mxu0 %v516
        %v1223 = vpop.f32.mrb[0].mxu0
        %v1224 = vadd.f32 0.0, %v1223
        %v1225 = vpop.f32.mrb[0].mxu0
        %1226 = vmatprep.mubr.f32.mxu0 0.0
        %1227 = vmatmul.mubr.f32.gmra.mrb[0].mxu0 %v517
        %v1228 = vpop.f32.mrb[0].mxu0
        %v1229 = vadd.f32 0.0, %v1228
        %v1230 = vpop.f32.mrb[0].mxu0
        %1231 = vmatprep.mubr.f32.mxu0 0.0
        %1232 = vmatmul.mubr.f32.gmra.mrb[0].mxu0 %v518
        %v1233 = vpop.f32.mrb[0].mxu0
        %v1234 = vadd.f32 0.0, %v1233
        %v1235 = vpop.f32.mrb[0].mxu0
        %1236 = vmatprep.mubr.f32.mxu0 0.0
        %1237 = vmatmul.mubr.f32.gmra.mrb[0].mxu0 %v519
        %v1238 = vpop.f32.mrb[0].mxu0
        %v1239 = vadd.f32 0.0, %v1238
        %v1240 = vpop.f32.mrb[0].mxu0
        %1241 = vdwg.mxu0
        %v1242 = vadd.f32 %v1081, %v1164
        %v1243 = vadd.f32 %v1082, %v1169
        %v1244 = vadd.f32 %v1083, %v1174
        %v1245 = vadd.f32 %v1084, %v1179
        %v1246 = vadd.f32 %v1085, %v1184
        %v1247 = vadd.f32 %v1086, %v1189
        %v1248 = vadd.f32 %v1087, %v1194
        %v1249 = vadd.f32 %v1088, %v1199
        %v1250 = vadd.f32 %v1089, %v1204
        %v1251 = vadd.f32 %v1090, %v1209
        %v1252 = vadd.f32 %v1091, %v1214
        %v1253 = vadd.f32 %v1092, %v1219
        %v1254 = vadd.f32 %v1093, %v1224
        %v1255 = vadd.f32 %v1094, %v1229
        %v1256 = vadd.f32 %v1095, %v1234
        %v1257 = vadd.f32 %v1096, %v1239
        %v1258 = vld [vmem:[%s7] sm:$0xff]
        %v1259 = vld [vmem:[%s7 + $0x8] sm:$0xff]
        %v1260 = vld [vmem:[%s7 + $0x10] sm:$0xff]
        %v1261 = vld [vmem:[%s7 + $0x18] sm:$0xff]
        %v1262 = vld [vmem:[%s7 + $0x20] sm:$0xff]
        %v1263 = vld [vmem:[%s7 + $0x28] sm:$0xff]
        %v1264 = vld [vmem:[%s7 + $0x30] sm:$0xff]
        %v1265 = vld [vmem:[%s7 + $0x38] sm:$0xff]
        %v1266 = vld [vmem:[%s7 + $0x40] sm:$0xff]
        %v1267 = vld [vmem:[%s7 + $0x48] sm:$0xff]
        %v1268 = vld [vmem:[%s7 + $0x50] sm:$0xff]
        %v1269 = vld [vmem:[%s7 + $0x58] sm:$0xff]
        %v1270 = vld [vmem:[%s7 + $0x60] sm:$0xff]
        %v1271 = vld [vmem:[%s7 + $0x68] sm:$0xff]
        %v1272 = vld [vmem:[%s7 + $0x70] sm:$0xff]
        %v1273 = vld [vmem:[%s7 + $0x78] sm:$0xff]
        %1274 = vmatprep.subr.mxu0 0.0
        %1275 = vmatpush1.msra.mxu0 %v1258
        %1276 = vmatprep.subr.mxu0 0.0
        %1277 = vmatpush1.msra.mxu0 %v1259
        %1278 = vmatprep.subr.mxu0 0.0
        %1279 = vmatpush1.msra.mxu0 %v1260
        %1280 = vmatprep.subr.mxu0 0.0
        %1281 = vmatpush1.msra.mxu0 %v1261
        %1282 = vmatprep.subr.mxu0 0.0
        %1283 = vmatpush1.msra.mxu0 %v1262
        %1284 = vmatprep.subr.mxu0 0.0
        %1285 = vmatpush1.msra.mxu0 %v1263
        %1286 = vmatprep.subr.mxu0 0.0
        %1287 = vmatpush1.msra.mxu0 %v1264
        %1288 = vmatprep.subr.mxu0 0.0
        %1289 = vmatpush1.msra.mxu0 %v1265
        %1290 = vmatprep.subr.mxu0 0.0
        %1291 = vmatpush1.msra.mxu0 %v1266
        %1292 = vmatprep.subr.mxu0 0.0
        %1293 = vmatpush1.msra.mxu0 %v1267
        %1294 = vmatprep.subr.mxu0 0.0
        %1295 = vmatpush1.msra.mxu0 %v1268
        %1296 = vmatprep.subr.mxu0 0.0
        %1297 = vmatpush1.msra.mxu0 %v1269
        %1298 = vmatprep.subr.mxu0 0.0
        %1299 = vmatpush1.msra.mxu0 %v1270
        %1300 = vmatprep.subr.mxu0 0.0
        %1301 = vmatpush1.msra.mxu0 %v1271
        %1302 = vmatprep.subr.mxu0 0.0
        %1303 = vmatpush1.msra.mxu0 %v1272
        %1304 = vmatprep.subr.mxu0 0.0
        %1305 = vmatpush1.msra.mxu0 %v1273
        %1306 = vmatprep.subr.mxu0 0.0
        %1307 = vmatpush1.msra.mxu0 0.0
        %1308 = vmatprep.subr.mxu0 0.0
        %1309 = vmatpush1.msra.mxu0 0.0
        %1310 = vmatprep.subr.mxu0 0.0
        %1311 = vmatpush1.msra.mxu0 0.0
        %1312 = vmatprep.subr.mxu0 0.0
        %1313 = vmatpush1.msra.mxu0 0.0
        %1314 = vmatprep.subr.mxu0 0.0
        %1315 = vmatpush1.msra.mxu0 0.0
        %1316 = vmatprep.subr.mxu0 0.0
        %1317 = vmatpush1.msra.mxu0 0.0
        %1318 = vmatprep.subr.mxu0 0.0
        %1319 = vmatpush1.msra.mxu0 0.0
        %1320 = vmatprep.subr.mxu0 0.0
        %1321 = vmatpush1.msra.mxu0 0.0
        %1322 = vmatprep.subr.mxu0 0.0
        %1323 = vmatpush1.msra.mxu0 0.0
        %1324 = vmatprep.subr.mxu0 0.0
        %1325 = vmatpush1.msra.mxu0 0.0
        %1326 = vmatprep.subr.mxu0 0.0
        %1327 = vmatpush1.msra.mxu0 0.0
        %1328 = vmatprep.subr.mxu0 0.0
        %1329 = vmatpush1.msra.mxu0 0.0
        %1330 = vmatprep.subr.mxu0 0.0
        %1331 = vmatpush1.msra.mxu0 0.0
        %1332 = vmatprep.subr.mxu0 0.0
        %1333 = vmatpush1.msra.mxu0 0.0
        %1334 = vmatprep.subr.mxu0 0.0
        %1335 = vmatpush1.msra.mxu0 0.0
        %1336 = vmatprep.subr.mxu0 0.0
        %1337 = vmatpush1.msra.mxu0 0.0
        %1338 = vmatprep.mubr.f32.mxu0 0.0
        %1339 = vmatmul.mubr.f32.gmra.mrb[0].mxu0 %v1242
        %v1340 = vpop.f32.mrb[0].mxu0
        %v1341 = vadd.f32 0.0, %v1340
        %v1342 = vpop.f32.mrb[0].mxu0
        %1343 = vmatprep.mubr.f32.mxu0 0.0
        %1344 = vmatmul.mubr.f32.gmra.mrb[0].mxu0 %v1243
        %v1345 = vpop.f32.mrb[0].mxu0
        %v1346 = vadd.f32 0.0, %v1345
        %v1347 = vpop.f32.mrb[0].mxu0
        %1348 = vmatprep.mubr.f32.mxu0 0.0
        %1349 = vmatmul.mubr.f32.gmra.mrb[0].mxu0 %v1244
        %v1350 = vpop.f32.mrb[0].mxu0
        %v1351 = vadd.f32 0.0, %v1350
        %v1352 = vpop.f32.mrb[0].mxu0
        %1353 = vmatprep.mubr.f32.mxu0 0.0
        %1354 = vmatmul.mubr.f32.gmra.mrb[0].mxu0 %v1245
        %v1355 = vpop.f32.mrb[0].mxu0
        %v1356 = vadd.f32 0.0, %v1355
        %v1357 = vpop.f32.mrb[0].mxu0
        %1358 = vmatprep.mubr.f32.mxu0 0.0
        %1359 = vmatmul.mubr.f32.gmra.mrb[0].mxu0 %v1246
        %v1360 = vpop.f32.mrb[0].mxu0
        %v1361 = vadd.f32 0.0, %v1360
        %v1362 = vpop.f32.mrb[0].mxu0
        %1363 = vmatprep.mubr.f32.mxu0 0.0
        %1364 = vmatmul.mubr.f32.gmra.mrb[0].mxu0 %v1247
        %v1365 = vpop.f32.mrb[0].mxu0
        %v1366 = vadd.f32 0.0, %v1365
        %v1367 = vpop.f32.mrb[0].mxu0
        %1368 = vmatprep.mubr.f32.mxu0 0.0
        %1369 = vmatmul.mubr.f32.gmra.mrb[0].mxu0 %v1248
        %v1370 = vpop.f32.mrb[0].mxu0
        %v1371 = vadd.f32 0.0, %v1370
        %v1372 = vpop.f32.mrb[0].mxu0
        %1373 = vmatprep.mubr.f32.mxu0 0.0
        %1374 = vmatmul.mubr.f32.gmra.mrb[0].mxu0 %v1249
        %v1375 = vpop.f32.mrb[0].mxu0
        %v1376 = vadd.f32 0.0, %v1375
        %v1377 = vpop.f32.mrb[0].mxu0
        %1378 = vmatprep.mubr.f32.mxu0 0.0
        %1379 = vmatmul.mubr.f32.gmra.mrb[0].mxu0 %v1250
        %v1380 = vpop.f32.mrb[0].mxu0
        %v1381 = vadd.f32 0.0, %v1380
        %v1382 = vpop.f32.mrb[0].mxu0
        %1383 = vmatprep.mubr.f32.mxu0 0.0
        %1384 = vmatmul.mubr.f32.gmra.mrb[0].mxu0 %v1251
        %v1385 = vpop.f32.mrb[0].mxu0
        %v1386 = vadd.f32 0.0, %v1385
        %v1387 = vpop.f32.mrb[0].mxu0
        %1388 = vmatprep.mubr.f32.mxu0 0.0
        %1389 = vmatmul.mubr.f32.gmra.mrb[0].mxu0 %v1252
        %v1390 = vpop.f32.mrb[0].mxu0
        %v1391 = vadd.f32 0.0, %v1390
        %v1392 = vpop.f32.mrb[0].mxu0
        %1393 = vmatprep.mubr.f32.mxu0 0.0
        %1394 = vmatmul.mubr.f32.gmra.mrb[0].mxu0 %v1253
        %v1395 = vpop.f32.mrb[0].mxu0
        %v1396 = vadd.f32 0.0, %v1395
        %v1397 = vpop.f32.mrb[0].mxu0
        %1398 = vmatprep.mubr.f32.mxu0 0.0
        %1399 = vmatmul.mubr.f32.gmra.mrb[0].mxu0 %v1254
        %v1400 = vpop.f32.mrb[0].mxu0
        %v1401 = vadd.f32 0.0, %v1400
        %v1402 = vpop.f32.mrb[0].mxu0
        %1403 = vmatprep.mubr.f32.mxu0 0.0
        %1404 = vmatmul.mubr.f32.gmra.mrb[0].mxu0 %v1255
        %v1405 = vpop.f32.mrb[0].mxu0
        %v1406 = vadd.f32 0.0, %v1405
        %v1407 = vpop.f32.mrb[0].mxu0
        %1408 = vmatprep.mubr.f32.mxu0 0.0
        %1409 = vmatmul.mubr.f32.gmra.mrb[0].mxu0 %v1256
        %v1410 = vpop.f32.mrb[0].mxu0
        %v1411 = vadd.f32 0.0, %v1410
        %v1412 = vpop.f32.mrb[0].mxu0
        %1413 = vmatprep.mubr.f32.mxu0 0.0
        %1414 = vmatmul.mubr.f32.gmra.mrb[0].mxu0 %v1257
        %v1415 = vpop.f32.mrb[0].mxu0
        %v1416 = vadd.f32 0.0, %v1415
        %v1417 = vpop.f32.mrb[0].mxu0
        %1418 = vdwg.mxu0
        %1419 = vst [vmem:[#allocation5] sm:$0xff] %v1341
        %1420 = vst [vmem:[#allocation5 + $0x8] sm:$0xff] %v1346
        %1421 = vst [vmem:[#allocation5 + $0x10] sm:$0xff] %v1351
        %1422 = vst [vmem:[#allocation5 + $0x18] sm:$0xff] %v1356
        %1423 = vst [vmem:[#allocation5 + $0x20] sm:$0xff] %v1361
        %1424 = vst [vmem:[#allocation5 + $0x28] sm:$0xff] %v1366
        %1425 = vst [vmem:[#allocation5 + $0x30] sm:$0xff] %v1371
        %1426 = vst [vmem:[#allocation5 + $0x38] sm:$0xff] %v1376
        %1427 = vst [vmem:[#allocation5 + $0x40] sm:$0xff] %v1381
        %1428 = vst [vmem:[#allocation5 + $0x48] sm:$0xff] %v1386
        %1429 = vst [vmem:[#allocation5 + $0x50] sm:$0xff] %v1391
        %1430 = vst [vmem:[#allocation5 + $0x58] sm:$0xff] %v1396
        %1431 = vst [vmem:[#allocation5 + $0x60] sm:$0xff] %v1401
        %1432 = vst [vmem:[#allocation5 + $0x68] sm:$0xff] %v1406
        %1433 = vst [vmem:[#allocation5 + $0x70] sm:$0xff] %v1411
        %1434 = vst [vmem:[#allocation5 + $0x78] sm:$0xff] %v1416
        %1435 = vadd.xlane.f32.xlu0 %v504
        %v1436 = vpop.xlane.xlu0 %1435
        %1437 = vadd.xlane.f32.xlu0 %v505
        %v1438 = vpop.xlane.xlu0 %1437
        %1439 = vadd.xlane.f32.xlu0 %v506
        %v1440 = vpop.xlane.xlu0 %1439
        %1441 = vadd.xlane.f32.xlu0 %v507
        %v1442 = vpop.xlane.xlu0 %1441
        %1443 = vadd.xlane.f32.xlu0 %v508
        %v1444 = vpop.xlane.xlu0 %1443
        %1445 = vadd.xlane.f32.xlu0 %v509
        %v1446 = vpop.xlane.xlu0 %1445
        %1447 = vadd.xlane.f32.xlu0 %v510
        %v1448 = vpop.xlane.xlu0 %1447
        %1449 = vadd.xlane.f32.xlu0 %v511
        %v1450 = vpop.xlane.xlu0 %1449
        %1451 = vadd.xlane.f32.xlu0 %v512
        %v1452 = vpop.xlane.xlu0 %1451
        %1453 = vadd.xlane.f32.xlu0 %v513
        %v1454 = vpop.xlane.xlu0 %1453
        %1455 = vadd.xlane.f32.xlu0 %v514
        %v1456 = vpop.xlane.xlu0 %1455
        %1457 = vadd.xlane.f32.xlu0 %v515
        %v1458 = vpop.xlane.xlu0 %1457
        %1459 = vadd.xlane.f32.xlu0 %v516
        %v1460 = vpop.xlane.xlu0 %1459
        %1461 = vadd.xlane.f32.xlu0 %v517
        %v1462 = vpop.xlane.xlu0 %1461
        %1463 = vadd.xlane.f32.xlu0 %v518
        %v1464 = vpop.xlane.xlu0 %1463
        %1465 = vadd.xlane.f32.xlu0 %v519
        %v1466 = vpop.xlane.xlu0 %1465
        %v1467 = vadd.f32 %v1436, 1.2
        %v1468 = vadd.f32 %v1438, 1.2
        %v1469 = vadd.f32 %v1440, 1.2
        %v1470 = vadd.f32 %v1442, 1.2
        %v1471 = vadd.f32 %v1444, 1.2
        %v1472 = vadd.f32 %v1446, 1.2
        %v1473 = vadd.f32 %v1448, 1.2
        %v1474 = vadd.f32 %v1450, 1.2
        %v1475 = vadd.f32 %v1452, 1.2
        %v1476 = vadd.f32 %v1454, 1.2
        %v1477 = vadd.f32 %v1456, 1.2
        %v1478 = vadd.f32 %v1458, 1.2
        %v1479 = vadd.f32 %v1460, 1.2
        %v1480 = vadd.f32 %v1462, 1.2
        %v1481 = vadd.f32 %v1464, 1.2
        %v1482 = vadd.f32 %v1466, 1.2
        %vm1483 = vcmask 7168
        %1484 = vst.msk [vmem:[#allocation6] sm:$0xff] %vm1483, %v1467
        %1485 = vst.msk [vmem:[#allocation6 + $0x8] sm:$0xff] %vm1483, %v1468
        %1486 = vst.msk [vmem:[#allocation6 + $0x10] sm:$0xff] %vm1483, %v1469
        %1487 = vst.msk [vmem:[#allocation6 + $0x18] sm:$0xff] %vm1483, %v1470
        %1488 = vst.msk [vmem:[#allocation6 + $0x20] sm:$0xff] %vm1483, %v1471
        %1489 = vst.msk [vmem:[#allocation6 + $0x28] sm:$0xff] %vm1483, %v1472
        %1490 = vst.msk [vmem:[#allocation6 + $0x30] sm:$0xff] %vm1483, %v1473
        %1491 = vst.msk [vmem:[#allocation6 + $0x38] sm:$0xff] %vm1483, %v1474
        %1492 = vst.msk [vmem:[#allocation6 + $0x40] sm:$0xff] %vm1483, %v1475
        %1493 = vst.msk [vmem:[#allocation6 + $0x48] sm:$0xff] %vm1483, %v1476
        %1494 = vst.msk [vmem:[#allocation6 + $0x50] sm:$0xff] %vm1483, %v1477
        %1495 = vst.msk [vmem:[#allocation6 + $0x58] sm:$0xff] %vm1483, %v1478
        %1496 = vst.msk [vmem:[#allocation6 + $0x60] sm:$0xff] %vm1483, %v1479
        %1497 = vst.msk [vmem:[#allocation6 + $0x68] sm:$0xff] %vm1483, %v1480
        %1498 = vst.msk [vmem:[#allocation6 + $0x70] sm:$0xff] %vm1483, %v1481
        %1499 = vst.msk [vmem:[#allocation6 + $0x78] sm:$0xff] %vm1483, %v1482
        %v1500 = vld [vmem:[%s8] sm:$0xff]
        %v1501 = vld [vmem:[%s8 + $0x8] sm:$0xff]
        %v1502 = vld [vmem:[%s8 + $0x10] sm:$0xff]
        %v1503 = vld [vmem:[%s8 + $0x18] sm:$0xff]
        %v1504 = vld [vmem:[%s8 + $0x20] sm:$0xff]
        %v1505 = vld [vmem:[%s8 + $0x28] sm:$0xff]
        %v1506 = vld [vmem:[%s8 + $0x30] sm:$0xff]
        %v1507 = vld [vmem:[%s8 + $0x38] sm:$0xff]
        %v1508 = vld [vmem:[%s8 + $0x40] sm:$0xff]
        %v1509 = vld [vmem:[%s8 + $0x48] sm:$0xff]
        %v1510 = vld [vmem:[%s8 + $0x50] sm:$0xff]
        %v1511 = vld [vmem:[%s8 + $0x58] sm:$0xff]
        %v1512 = vld [vmem:[%s8 + $0x60] sm:$0xff]
        %v1513 = vld [vmem:[%s8 + $0x68] sm:$0xff]
        %v1514 = vld [vmem:[%s8 + $0x70] sm:$0xff]
        %v1515 = vld [vmem:[%s8 + $0x78] sm:$0xff]
        %v1516 = vld [vmem:[%s7] sm:$0xff]
        %v1517 = vld [vmem:[%s7 + $0x8] sm:$0xff]
        %v1518 = vld [vmem:[%s7 + $0x10] sm:$0xff]
        %v1519 = vld [vmem:[%s7 + $0x18] sm:$0xff]
        %v1520 = vld [vmem:[%s7 + $0x20] sm:$0xff]
        %v1521 = vld [vmem:[%s7 + $0x28] sm:$0xff]
        %v1522 = vld [vmem:[%s7 + $0x30] sm:$0xff]
        %v1523 = vld [vmem:[%s7 + $0x38] sm:$0xff]
        %v1524 = vld [vmem:[%s7 + $0x40] sm:$0xff]
        %v1525 = vld [vmem:[%s7 + $0x48] sm:$0xff]
        %v1526 = vld [vmem:[%s7 + $0x50] sm:$0xff]
        %v1527 = vld [vmem:[%s7 + $0x58] sm:$0xff]
        %v1528 = vld [vmem:[%s7 + $0x60] sm:$0xff]
        %v1529 = vld [vmem:[%s7 + $0x68] sm:$0xff]
        %v1530 = vld [vmem:[%s7 + $0x70] sm:$0xff]
        %v1531 = vld [vmem:[%s7 + $0x78] sm:$0xff]
        %v1532 = vsub.f32 %v1500, %v1516
        %v1533 = vsub.f32 %v1501, %v1517
        %v1534 = vsub.f32 %v1502, %v1518
        %v1535 = vsub.f32 %v1503, %v1519
        %v1536 = vsub.f32 %v1504, %v1520
        %v1537 = vsub.f32 %v1505, %v1521
        %v1538 = vsub.f32 %v1506, %v1522
        %v1539 = vsub.f32 %v1507, %v1523
        %v1540 = vsub.f32 %v1508, %v1524
        %v1541 = vsub.f32 %v1509, %v1525
        %v1542 = vsub.f32 %v1510, %v1526
        %v1543 = vsub.f32 %v1511, %v1527
        %v1544 = vsub.f32 %v1512, %v1528
        %v1545 = vsub.f32 %v1513, %v1529
        %v1546 = vsub.f32 %v1514, %v1530
        %v1547 = vsub.f32 %v1515, %v1531
        %1548 = vst [vmem:[#allocation7] sm:$0xff] %v1532
        %1549 = vst [vmem:[#allocation7 + $0x8] sm:$0xff] %v1533
        %1550 = vst [vmem:[#allocation7 + $0x10] sm:$0xff] %v1534
        %1551 = vst [vmem:[#allocation7 + $0x18] sm:$0xff] %v1535
        %1552 = vst [vmem:[#allocation7 + $0x20] sm:$0xff] %v1536
        %1553 = vst [vmem:[#allocation7 + $0x28] sm:$0xff] %v1537
        %1554 = vst [vmem:[#allocation7 + $0x30] sm:$0xff] %v1538
        %1555 = vst [vmem:[#allocation7 + $0x38] sm:$0xff] %v1539
        %1556 = vst [vmem:[#allocation7 + $0x40] sm:$0xff] %v1540
        %1557 = vst [vmem:[#allocation7 + $0x48] sm:$0xff] %v1541
        %1558 = vst [vmem:[#allocation7 + $0x50] sm:$0xff] %v1542
        %1559 = vst [vmem:[#allocation7 + $0x58] sm:$0xff] %v1543
        %1560 = vst [vmem:[#allocation7 + $0x60] sm:$0xff] %v1544
        %1561 = vst [vmem:[#allocation7 + $0x68] sm:$0xff] %v1545
        %1562 = vst [vmem:[#allocation7 + $0x70] sm:$0xff] %v1546
        %1563 = vst [vmem:[#allocation7 + $0x78] sm:$0xff] %v1547
        %v1564 = vld [vmem:[%s2] sm:$0xff]
        %1565 = vadd.xlane.f32.xlu0 %v1564
        %v1566 = vpop.xlane.xlu0 %1565
        %v1567 = vld [vmem:[%s11] sm:$0x1]
        %v1569 = vlaneseq
        %v1570 = vshrl.u32 %v1569, 7
        %v1571 = vsub.s32 0, %v1570
        %v1572 = vrot.slane %v1567, %v1571
        %v1574 = vmul.f32 %v1566, %v1572
        %1575 = vst [vmem:[#allocation8] sm:$0xff] %v1574
      $region76: #{graph_ant_forward.1} parent=71 // pred_fallthru
        _
      %s1576 = scalar_lea.vmem [#allocation4], %s27
      %v1577 = vld [vmem:[%s1576] sm:$0x1]
      %v1578 = vld [vmem:[#allocation7] sm:$0xff]
      %v1579 = vld [vmem:[#allocation7 + $0x8] sm:$0xff]
      %v1580 = vld [vmem:[#allocation7 + $0x10] sm:$0xff]
      %v1581 = vld [vmem:[#allocation7 + $0x18] sm:$0xff]
      %v1582 = vld [vmem:[#allocation7 + $0x20] sm:$0xff]
      %v1583 = vld [vmem:[#allocation7 + $0x28] sm:$0xff]
      %v1584 = vld [vmem:[#allocation7 + $0x30] sm:$0xff]
      %v1585 = vld [vmem:[#allocation7 + $0x38] sm:$0xff]
      %v1586 = vld [vmem:[#allocation7 + $0x40] sm:$0xff]
      %v1587 = vld [vmem:[#allocation7 + $0x48] sm:$0xff]
      %v1588 = vld [vmem:[#allocation7 + $0x50] sm:$0xff]
      %v1589 = vld [vmem:[#allocation7 + $0x58] sm:$0xff]
      %v1590 = vld [vmem:[#allocation7 + $0x60] sm:$0xff]
      %v1591 = vld [vmem:[#allocation7 + $0x68] sm:$0xff]
      %v1592 = vld [vmem:[#allocation7 + $0x70] sm:$0xff]
      %v1593 = vld [vmem:[#allocation7 + $0x78] sm:$0xff]
      %1594 = vmatprep.subr.mxu0 0.0
      %1595 = vmatpush1.msra.mxu0 %v1578
      %1596 = vmatprep.subr.mxu0 0.0
      %1597 = vmatpush1.msra.mxu0 %v1579
      %1598 = vmatprep.subr.mxu0 0.0
      %1599 = vmatpush1.msra.mxu0 %v1580
      %1600 = vmatprep.subr.mxu0 0.0
      %1601 = vmatpush1.msra.mxu0 %v1581
      %1602 = vmatprep.subr.mxu0 0.0
      %1603 = vmatpush1.msra.mxu0 %v1582
      %1604 = vmatprep.subr.mxu0 0.0
      %1605 = vmatpush1.msra.mxu0 %v1583
      %1606 = vmatprep.subr.mxu0 0.0
      %1607 = vmatpush1.msra.mxu0 %v1584
      %1608 = vmatprep.subr.mxu0 0.0
      %1609 = vmatpush1.msra.mxu0 %v1585
      %1610 = vmatprep.subr.mxu0 0.0
      %1611 = vmatpush1.msra.mxu0 %v1586
      %1612 = vmatprep.subr.mxu0 0.0
      %1613 = vmatpush1.msra.mxu0 %v1587
      %1614 = vmatprep.subr.mxu0 0.0
      %1615 = vmatpush1.msra.mxu0 %v1588
      %1616 = vmatprep.subr.mxu0 0.0
      %1617 = vmatpush1.msra.mxu0 %v1589
      %1618 = vmatprep.subr.mxu0 0.0
      %1619 = vmatpush1.msra.mxu0 %v1590
      %1620 = vmatprep.subr.mxu0 0.0
      %1621 = vmatpush1.msra.mxu0 %v1591
      %1622 = vmatprep.subr.mxu0 0.0
      %1623 = vmatpush1.msra.mxu0 %v1592
      %1624 = vmatprep.subr.mxu0 0.0
      %1625 = vmatpush1.msra.mxu0 %v1593
      %1626 = vmatprep.subr.mxu0 0.0
      %1627 = vmatpush1.msra.mxu0 0.0
      %1628 = vmatprep.subr.mxu0 0.0
      %1629 = vmatpush1.msra.mxu0 0.0
      %1630 = vmatprep.subr.mxu0 0.0
      %1631 = vmatpush1.msra.mxu0 0.0
      %1632 = vmatprep.subr.mxu0 0.0
      %1633 = vmatpush1.msra.mxu0 0.0
      %1634 = vmatprep.subr.mxu0 0.0
      %1635 = vmatpush1.msra.mxu0 0.0
      %1636 = vmatprep.subr.mxu0 0.0
      %1637 = vmatpush1.msra.mxu0 0.0
      %1638 = vmatprep.subr.mxu0 0.0
      %1639 = vmatpush1.msra.mxu0 0.0
      %1640 = vmatprep.subr.mxu0 0.0
      %1641 = vmatpush1.msra.mxu0 0.0
      %1642 = vmatprep.subr.mxu0 0.0
      %1643 = vmatpush1.msra.mxu0 0.0
      %1644 = vmatprep.subr.mxu0 0.0
      %1645 = vmatpush1.msra.mxu0 0.0
      %1646 = vmatprep.subr.mxu0 0.0
      %1647 = vmatpush1.msra.mxu0 0.0
      %1648 = vmatprep.subr.mxu0 0.0
      %1649 = vmatpush1.msra.mxu0 0.0
      %1650 = vmatprep.subr.mxu0 0.0
      %1651 = vmatpush1.msra.mxu0 0.0
      %1652 = vmatprep.subr.mxu0 0.0
      %1653 = vmatpush1.msra.mxu0 0.0
      %1654 = vmatprep.subr.mxu0 0.0
      %1655 = vmatpush1.msra.mxu0 0.0
      %1656 = vmatprep.subr.mxu0 0.0
      %1657 = vmatpush1.msra.mxu0 0.0
      %1658 = vmatprep.mubr.f32.mxu0 0.0
      %1659 = vmatmul.mubr.f32.gmra.mrb[0].mxu0 %v1577
      %v1660 = vpop.f32.mrb[0].mxu0
      %v1661 = vadd.f32 0.0, %v1660
      %v1662 = vpop.f32.mrb[0].mxu0
      %1663 = vdwg.mxu0
      %v1664 = vld [vmem:[#allocation5] sm:$0xff]
      %v1665 = vld [vmem:[#allocation5 + $0x8] sm:$0xff]
      %v1666 = vld [vmem:[#allocation5 + $0x10] sm:$0xff]
      %v1667 = vld [vmem:[#allocation5 + $0x18] sm:$0xff]
      %v1668 = vld [vmem:[#allocation5 + $0x20] sm:$0xff]
      %v1669 = vld [vmem:[#allocation5 + $0x28] sm:$0xff]
      %v1670 = vld [vmem:[#allocation5 + $0x30] sm:$0xff]
      %v1671 = vld [vmem:[#allocation5 + $0x38] sm:$0xff]
      %v1672 = vld [vmem:[#allocation5 + $0x40] sm:$0xff]
      %v1673 = vld [vmem:[#allocation5 + $0x48] sm:$0xff]
      %v1674 = vld [vmem:[#allocation5 + $0x50] sm:$0xff]
      %v1675 = vld [vmem:[#allocation5 + $0x58] sm:$0xff]
      %v1676 = vld [vmem:[#allocation5 + $0x60] sm:$0xff]
      %v1677 = vld [vmem:[#allocation5 + $0x68] sm:$0xff]
      %v1678 = vld [vmem:[#allocation5 + $0x70] sm:$0xff]
      %v1679 = vld [vmem:[#allocation5 + $0x78] sm:$0xff]
      %v1680 = vld [vmem:[#allocation6] sm:$0xff]
      %v1681 = vld [vmem:[#allocation6 + $0x8] sm:$0xff]
      %v1682 = vld [vmem:[#allocation6 + $0x10] sm:$0xff]
      %v1683 = vld [vmem:[#allocation6 + $0x18] sm:$0xff]
      %v1684 = vld [vmem:[#allocation6 + $0x20] sm:$0xff]
      %v1685 = vld [vmem:[#allocation6 + $0x28] sm:$0xff]
      %v1686 = vld [vmem:[#allocation6 + $0x30] sm:$0xff]
      %v1687 = vld [vmem:[#allocation6 + $0x38] sm:$0xff]
      %v1688 = vld [vmem:[#allocation6 + $0x40] sm:$0xff]
      %v1689 = vld [vmem:[#allocation6 + $0x48] sm:$0xff]
      %v1690 = vld [vmem:[#allocation6 + $0x50] sm:$0xff]
      %v1691 = vld [vmem:[#allocation6 + $0x58] sm:$0xff]
      %v1692 = vld [vmem:[#allocation6 + $0x60] sm:$0xff]
      %v1693 = vld [vmem:[#allocation6 + $0x68] sm:$0xff]
      %v1694 = vld [vmem:[#allocation6 + $0x70] sm:$0xff]
      %v1695 = vld [vmem:[#allocation6 + $0x78] sm:$0xff]
      %1697 = vset.pattern.permute.xlu0 0
      %1698 = vperm.xlu0 %1697, %v1680
      %v1699 = vpop.permute.xlu0 %1698
      %1702 = vset.pattern.permute.xlu0 0
      %1703 = vperm.xlu0 %1702, %v1681
      %v1704 = vpop.permute.xlu0 %1703
      %1707 = vset.pattern.permute.xlu0 0
      %1708 = vperm.xlu0 %1707, %v1682
      %v1709 = vpop.permute.xlu0 %1708
      %1712 = vset.pattern.permute.xlu0 0
      %1713 = vperm.xlu0 %1712, %v1683
      %v1714 = vpop.permute.xlu0 %1713
      %1717 = vset.pattern.permute.xlu0 0
      %1718 = vperm.xlu0 %1717, %v1684
      %v1719 = vpop.permute.xlu0 %1718
      %1722 = vset.pattern.permute.xlu0 0
      %1723 = vperm.xlu0 %1722, %v1685
      %v1724 = vpop.permute.xlu0 %1723
      %1727 = vset.pattern.permute.xlu0 0
      %1728 = vperm.xlu0 %1727, %v1686
      %v1729 = vpop.permute.xlu0 %1728
      %1732 = vset.pattern.permute.xlu0 0
      %1733 = vperm.xlu0 %1732, %v1687
      %v1734 = vpop.permute.xlu0 %1733
      %1737 = vset.pattern.permute.xlu0 0
      %1738 = vperm.xlu0 %1737, %v1688
      %v1739 = vpop.permute.xlu0 %1738
      %1742 = vset.pattern.permute.xlu0 0
      %1743 = vperm.xlu0 %1742, %v1689
      %v1744 = vpop.permute.xlu0 %1743
      %1747 = vset.pattern.permute.xlu0 0
      %1748 = vperm.xlu0 %1747, %v1690
      %v1749 = vpop.permute.xlu0 %1748
      %1752 = vset.pattern.permute.xlu0 0
      %1753 = vperm.xlu0 %1752, %v1691
      %v1754 = vpop.permute.xlu0 %1753
      %1757 = vset.pattern.permute.xlu0 0
      %1758 = vperm.xlu0 %1757, %v1692
      %v1759 = vpop.permute.xlu0 %1758
      %1762 = vset.pattern.permute.xlu0 0
      %1763 = vperm.xlu0 %1762, %v1693
      %v1764 = vpop.permute.xlu0 %1763
      %1767 = vset.pattern.permute.xlu0 0
      %1768 = vperm.xlu0 %1767, %v1694
      %v1769 = vpop.permute.xlu0 %1768
      %1772 = vset.pattern.permute.xlu0 0
      %1773 = vperm.xlu0 %1772, %v1695
      %v1774 = vpop.permute.xlu0 %1773
      %v1776 = vlaneseq
      %v1777 = vshrl.u32 %v1776, 7
      %v1778 = vsub.s32 0, %v1777
      %v1779 = vrot.slane %v1661, %v1778
      %v1780 = vmul.f32 %v1699, %v1779
      %v1781 = vmul.f32 %v1704, %v1779
      %v1782 = vmul.f32 %v1709, %v1779
      %v1783 = vmul.f32 %v1714, %v1779
      %v1784 = vmul.f32 %v1719, %v1779
      %v1785 = vmul.f32 %v1724, %v1779
      %v1786 = vmul.f32 %v1729, %v1779
      %v1787 = vmul.f32 %v1734, %v1779
      %v1788 = vmul.f32 %v1739, %v1779
      %v1789 = vmul.f32 %v1744, %v1779
      %v1790 = vmul.f32 %v1749, %v1779
      %v1791 = vmul.f32 %v1754, %v1779
      %v1792 = vmul.f32 %v1759, %v1779
      %v1793 = vmul.f32 %v1764, %v1779
      %v1794 = vmul.f32 %v1769, %v1779
      %v1795 = vmul.f32 %v1774, %v1779
      %v1796 = vadd.f32 %v1664, %v1780
      %v1797 = vadd.f32 %v1665, %v1781
      %v1798 = vadd.f32 %v1666, %v1782
      %v1799 = vadd.f32 %v1667, %v1783
      %v1800 = vadd.f32 %v1668, %v1784
      %v1801 = vadd.f32 %v1669, %v1785
      %v1802 = vadd.f32 %v1670, %v1786
      %v1803 = vadd.f32 %v1671, %v1787
      %v1804 = vadd.f32 %v1672, %v1788
      %v1805 = vadd.f32 %v1673, %v1789
      %v1806 = vadd.f32 %v1674, %v1790
      %v1807 = vadd.f32 %v1675, %v1791
      %v1808 = vadd.f32 %v1676, %v1792
      %v1809 = vadd.f32 %v1677, %v1793
      %v1810 = vadd.f32 %v1678, %v1794
      %v1811 = vadd.f32 %v1679, %v1795
      %v1812 = vld [vmem:[%s9] sm:$0x1]
      %v1814 = vlaneseq
      %v1815 = vshrl.u32 %v1814, 7
      %v1816 = vsub.s32 0, %v1815
      %v1817 = vrot.slane %v1812, %v1816
      %v1819 = vadd.f32 %v1796, %v1817
      %v1820 = vadd.f32 %v1797, %v1817
      %v1821 = vadd.f32 %v1798, %v1817
      %v1822 = vadd.f32 %v1799, %v1817
      %v1823 = vadd.f32 %v1800, %v1817
      %v1824 = vadd.f32 %v1801, %v1817
      %v1825 = vadd.f32 %v1802, %v1817
      %v1826 = vadd.f32 %v1803, %v1817
      %v1827 = vadd.f32 %v1804, %v1817
      %v1828 = vadd.f32 %v1805, %v1817
      %v1829 = vadd.f32 %v1806, %v1817
      %v1830 = vadd.f32 %v1807, %v1817
      %v1831 = vadd.f32 %v1808, %v1817
      %v1832 = vadd.f32 %v1809, %v1817
      %v1833 = vadd.f32 %v1810, %v1817
      %v1834 = vadd.f32 %v1811, %v1817
      %v1835 = vmax.f32 %v1819, 0.0
      %v1836 = vmax.f32 %v1820, 0.0
      %v1837 = vmax.f32 %v1821, 0.0
      %v1838 = vmax.f32 %v1822, 0.0
      %v1839 = vmax.f32 %v1823, 0.0
      %v1840 = vmax.f32 %v1824, 0.0
      %v1841 = vmax.f32 %v1825, 0.0
      %v1842 = vmax.f32 %v1826, 0.0
      %v1843 = vmax.f32 %v1827, 0.0
      %v1844 = vmax.f32 %v1828, 0.0
      %v1845 = vmax.f32 %v1829, 0.0
      %v1846 = vmax.f32 %v1830, 0.0
      %v1847 = vmax.f32 %v1831, 0.0
      %v1848 = vmax.f32 %v1832, 0.0
      %v1849 = vmax.f32 %v1833, 0.0
      %v1850 = vmax.f32 %v1834, 0.0
      %v1851 = vld [vmem:[%s2] sm:$0xff]
      %1852 = vmatprep.subr.mxu0 0.0
      %1853 = vmatpush1.msra.mxu0 %v1835
      %1854 = vmatprep.subr.mxu0 0.0
      %1855 = vmatpush1.msra.mxu0 %v1836
      %1856 = vmatprep.subr.mxu0 0.0
      %1857 = vmatpush1.msra.mxu0 %v1837
      %1858 = vmatprep.subr.mxu0 0.0
      %1859 = vmatpush1.msra.mxu0 %v1838
      %1860 = vmatprep.subr.mxu0 0.0
      %1861 = vmatpush1.msra.mxu0 %v1839
      %1862 = vmatprep.subr.mxu0 0.0
      %1863 = vmatpush1.msra.mxu0 %v1840
      %1864 = vmatprep.subr.mxu0 0.0
      %1865 = vmatpush1.msra.mxu0 %v1841
      %1866 = vmatprep.subr.mxu0 0.0
      %1867 = vmatpush1.msra.mxu0 %v1842
      %1868 = vmatprep.subr.mxu0 0.0
      %1869 = vmatpush1.msra.mxu0 %v1843
      %1870 = vmatprep.subr.mxu0 0.0
      %1871 = vmatpush1.msra.mxu0 %v1844
      %1872 = vmatprep.subr.mxu0 0.0
      %1873 = vmatpush1.msra.mxu0 %v1845
      %1874 = vmatprep.subr.mxu0 0.0
      %1875 = vmatpush1.msra.mxu0 %v1846
      %1876 = vmatprep.subr.mxu0 0.0
      %1877 = vmatpush1.msra.mxu0 %v1847
      %1878 = vmatprep.subr.mxu0 0.0
      %1879 = vmatpush1.msra.mxu0 %v1848
      %1880 = vmatprep.subr.mxu0 0.0
      %1881 = vmatpush1.msra.mxu0 %v1849
      %1882 = vmatprep.subr.mxu0 0.0
      %1883 = vmatpush1.msra.mxu0 %v1850
      %1884 = vmatprep.subr.mxu0 0.0
      %1885 = vmatpush1.msra.mxu0 0.0
      %1886 = vmatprep.subr.mxu0 0.0
      %1887 = vmatpush1.msra.mxu0 0.0
      %1888 = vmatprep.subr.mxu0 0.0
      %1889 = vmatpush1.msra.mxu0 0.0
      %1890 = vmatprep.subr.mxu0 0.0
      %1891 = vmatpush1.msra.mxu0 0.0
      %1892 = vmatprep.subr.mxu0 0.0
      %1893 = vmatpush1.msra.mxu0 0.0
      %1894 = vmatprep.subr.mxu0 0.0
      %1895 = vmatpush1.msra.mxu0 0.0
      %1896 = vmatprep.subr.mxu0 0.0
      %1897 = vmatpush1.msra.mxu0 0.0
      %1898 = vmatprep.subr.mxu0 0.0
      %1899 = vmatpush1.msra.mxu0 0.0
      %1900 = vmatprep.subr.mxu0 0.0
      %1901 = vmatpush1.msra.mxu0 0.0
      %1902 = vmatprep.subr.mxu0 0.0
      %1903 = vmatpush1.msra.mxu0 0.0
      %1904 = vmatprep.subr.mxu0 0.0
      %1905 = vmatpush1.msra.mxu0 0.0
      %1906 = vmatprep.subr.mxu0 0.0
      %1907 = vmatpush1.msra.mxu0 0.0
      %1908 = vmatprep.subr.mxu0 0.0
      %1909 = vmatpush1.msra.mxu0 0.0
      %1910 = vmatprep.subr.mxu0 0.0
      %1911 = vmatpush1.msra.mxu0 0.0
      %1912 = vmatprep.subr.mxu0 0.0
      %1913 = vmatpush1.msra.mxu0 0.0
      %1914 = vmatprep.subr.mxu0 0.0
      %1915 = vmatpush1.msra.mxu0 0.0
      %1916 = vmatprep.mubr.f32.mxu0 0.0
      %1917 = vmatmul.mubr.f32.gmra.mrb[0].mxu0 %v1851
      %v1918 = vpop.f32.mrb[0].mxu0
      %v1919 = vadd.f32 0.0, %v1918
      %v1920 = vpop.f32.mrb[0].mxu0
      %1921 = vdwg.mxu0
      %v1922 = vld [vmem:[%s10] sm:$0xff]
      %v1923 = vld [vmem:[%s10 + $0x8] sm:$0xff]
      %v1924 = vld [vmem:[%s10 + $0x10] sm:$0xff]
      %v1925 = vld [vmem:[%s10 + $0x18] sm:$0xff]
      %v1926 = vld [vmem:[%s10 + $0x20] sm:$0xff]
      %v1927 = vld [vmem:[%s10 + $0x28] sm:$0xff]
      %v1928 = vld [vmem:[%s10 + $0x30] sm:$0xff]
      %v1929 = vld [vmem:[%s10 + $0x38] sm:$0xff]
      %v1930 = vld [vmem:[%s10 + $0x40] sm:$0xff]
      %v1931 = vld [vmem:[%s10 + $0x48] sm:$0xff]
      %v1932 = vld [vmem:[%s10 + $0x50] sm:$0xff]
      %v1933 = vld [vmem:[%s10 + $0x58] sm:$0xff]
      %v1934 = vld [vmem:[%s10 + $0x60] sm:$0xff]
      %v1935 = vld [vmem:[%s10 + $0x68] sm:$0xff]
      %v1936 = vld [vmem:[%s10 + $0x70] sm:$0xff]
      %v1937 = vld [vmem:[%s10 + $0x78] sm:$0xff]
      %v1938 = vld [vmem:[#allocation8] sm:$0xff]
      %1939 = vmatprep.subr.mxu0 0.0
      %1940 = vmatpush1.msra.mxu0 %v1922
      %1941 = vmatprep.subr.mxu0 0.0
      %1942 = vmatpush1.msra.mxu0 %v1923
      %1943 = vmatprep.subr.mxu0 0.0
      %1944 = vmatpush1.msra.mxu0 %v1924
      %1945 = vmatprep.subr.mxu0 0.0
      %1946 = vmatpush1.msra.mxu0 %v1925
      %1947 = vmatprep.subr.mxu0 0.0
      %1948 = vmatpush1.msra.mxu0 %v1926
      %1949 = vmatprep.subr.mxu0 0.0
      %1950 = vmatpush1.msra.mxu0 %v1927
      %1951 = vmatprep.subr.mxu0 0.0
      %1952 = vmatpush1.msra.mxu0 %v1928
      %1953 = vmatprep.subr.mxu0 0.0
      %1954 = vmatpush1.msra.mxu0 %v1929
      %1955 = vmatprep.subr.mxu0 0.0
      %1956 = vmatpush1.msra.mxu0 %v1930
      %1957 = vmatprep.subr.mxu0 0.0
      %1958 = vmatpush1.msra.mxu0 %v1931
      %1959 = vmatprep.subr.mxu0 0.0
      %1960 = vmatpush1.msra.mxu0 %v1932
      %1961 = vmatprep.subr.mxu0 0.0
      %1962 = vmatpush1.msra.mxu0 %v1933
      %1963 = vmatprep.subr.mxu0 0.0
      %1964 = vmatpush1.msra.mxu0 %v1934
      %1965 = vmatprep.subr.mxu0 0.0
      %1966 = vmatpush1.msra.mxu0 %v1935
      %1967 = vmatprep.subr.mxu0 0.0
      %1968 = vmatpush1.msra.mxu0 %v1936
      %1969 = vmatprep.subr.mxu0 0.0
      %1970 = vmatpush1.msra.mxu0 %v1937
      %1971 = vmatprep.subr.mxu0 0.0
      %1972 = vmatpush1.msra.mxu0 0.0
      %1973 = vmatprep.subr.mxu0 0.0
      %1974 = vmatpush1.msra.mxu0 0.0
      %1975 = vmatprep.subr.mxu0 0.0
      %1976 = vmatpush1.msra.mxu0 0.0
      %1977 = vmatprep.subr.mxu0 0.0
      %1978 = vmatpush1.msra.mxu0 0.0
      %1979 = vmatprep.subr.mxu0 0.0
      %1980 = vmatpush1.msra.mxu0 0.0
      %1981 = vmatprep.subr.mxu0 0.0
      %1982 = vmatpush1.msra.mxu0 0.0
      %1983 = vmatprep.subr.mxu0 0.0
      %1984 = vmatpush1.msra.mxu0 0.0
      %1985 = vmatprep.subr.mxu0 0.0
      %1986 = vmatpush1.msra.mxu0 0.0
      %1987 = vmatprep.subr.mxu0 0.0
      %1988 = vmatpush1.msra.mxu0 0.0
      %1989 = vmatprep.subr.mxu0 0.0
      %1990 = vmatpush1.msra.mxu0 0.0
      %1991 = vmatprep.subr.mxu0 0.0
      %1992 = vmatpush1.msra.mxu0 0.0
      %1993 = vmatprep.subr.mxu0 0.0
      %1994 = vmatpush1.msra.mxu0 0.0
      %1995 = vmatprep.subr.mxu0 0.0
      %1996 = vmatpush1.msra.mxu0 0.0
      %1997 = vmatprep.subr.mxu0 0.0
      %1998 = vmatpush1.msra.mxu0 0.0
      %1999 = vmatprep.subr.mxu0 0.0
      %2000 = vmatpush1.msra.mxu0 0.0
      %2001 = vmatprep.subr.mxu0 0.0
      %2002 = vmatpush1.msra.mxu0 0.0
      %2003 = vmatprep.mubr.f32.mxu0 0.0
      %2004 = vmatmul.mubr.f32.gmra.mrb[0].mxu0 %v1919
      %v2005 = vpop.f32.mrb[0].mxu0
      %v2006 = vadd.f32 %v1938, %v2005
      %v2007 = vpop.f32.mrb[0].mxu0
      %2008 = vdwg.mxu0
      %v2009 = vld [vmem:[%s12] sm:$0xff]
      %v2010 = vld [vmem:[%s12 + $0x8] sm:$0xff]
      %v2011 = vld [vmem:[%s12 + $0x10] sm:$0xff]
      %v2012 = vld [vmem:[%s12 + $0x18] sm:$0xff]
      %v2013 = vld [vmem:[%s12 + $0x20] sm:$0xff]
      %v2014 = vld [vmem:[%s12 + $0x28] sm:$0xff]
      %v2015 = vld [vmem:[%s12 + $0x30] sm:$0xff]
      %v2016 = vld [vmem:[%s12 + $0x38] sm:$0xff]
      %v2017 = vld [vmem:[%s12 + $0x40] sm:$0xff]
      %v2018 = vld [vmem:[%s12 + $0x48] sm:$0xff]
      %v2019 = vld [vmem:[%s12 + $0x50] sm:$0xff]
      %v2020 = vld [vmem:[%s12 + $0x58] sm:$0xff]
      %v2021 = vld [vmem:[%s12 + $0x60] sm:$0xff]
      %v2022 = vld [vmem:[%s12 + $0x68] sm:$0xff]
      %v2023 = vld [vmem:[%s12 + $0x70] sm:$0xff]
      %v2024 = vld [vmem:[%s12 + $0x78] sm:$0xff]
      %v2025 = vld [vmem:[%s13] sm:$0x1]
      %v2027 = vlaneseq
      %v2028 = vshrl.u32 %v2027, 7
      %v2029 = vsub.s32 0, %v2028
      %v2030 = vrot.slane %v2025, %v2029
      %2032 = vmatprep.subr.mxu0 0.0
      %2033 = vmatpush1.msra.mxu0 %v2009
      %2034 = vmatprep.subr.mxu0 0.0
      %2035 = vmatpush1.msra.mxu0 %v2010
      %2036 = vmatprep.subr.mxu0 0.0
      %2037 = vmatpush1.msra.mxu0 %v2011
      %2038 = vmatprep.subr.mxu0 0.0
      %2039 = vmatpush1.msra.mxu0 %v2012
      %2040 = vmatprep.subr.mxu0 0.0
      %2041 = vmatpush1.msra.mxu0 %v2013
      %2042 = vmatprep.subr.mxu0 0.0
      %2043 = vmatpush1.msra.mxu0 %v2014
      %2044 = vmatprep.subr.mxu0 0.0
      %2045 = vmatpush1.msra.mxu0 %v2015
      %2046 = vmatprep.subr.mxu0 0.0
      %2047 = vmatpush1.msra.mxu0 %v2016
      %2048 = vmatprep.subr.mxu0 0.0
      %2049 = vmatpush1.msra.mxu0 %v2017
      %2050 = vmatprep.subr.mxu0 0.0
      %2051 = vmatpush1.msra.mxu0 %v2018
      %2052 = vmatprep.subr.mxu0 0.0
      %2053 = vmatpush1.msra.mxu0 %v2019
      %2054 = vmatprep.subr.mxu0 0.0
      %2055 = vmatpush1.msra.mxu0 %v2020
      %2056 = vmatprep.subr.mxu0 0.0
      %2057 = vmatpush1.msra.mxu0 %v2021
      %2058 = vmatprep.subr.mxu0 0.0
      %2059 = vmatpush1.msra.mxu0 %v2022
      %2060 = vmatprep.subr.mxu0 0.0
      %2061 = vmatpush1.msra.mxu0 %v2023
      %2062 = vmatprep.subr.mxu0 0.0
      %2063 = vmatpush1.msra.mxu0 %v2024
      %2064 = vmatprep.subr.mxu0 0.0
      %2065 = vmatpush1.msra.mxu0 0.0
      %2066 = vmatprep.subr.mxu0 0.0
      %2067 = vmatpush1.msra.mxu0 0.0
      %2068 = vmatprep.subr.mxu0 0.0
      %2069 = vmatpush1.msra.mxu0 0.0
      %2070 = vmatprep.subr.mxu0 0.0
      %2071 = vmatpush1.msra.mxu0 0.0
      %2072 = vmatprep.subr.mxu0 0.0
      %2073 = vmatpush1.msra.mxu0 0.0
      %2074 = vmatprep.subr.mxu0 0.0
      %2075 = vmatpush1.msra.mxu0 0.0
      %2076 = vmatprep.subr.mxu0 0.0
      %2077 = vmatpush1.msra.mxu0 0.0
      %2078 = vmatprep.subr.mxu0 0.0
      %2079 = vmatpush1.msra.mxu0 0.0
      %2080 = vmatprep.subr.mxu0 0.0
      %2081 = vmatpush1.msra.mxu0 0.0
      %2082 = vmatprep.subr.mxu0 0.0
      %2083 = vmatpush1.msra.mxu0 0.0
      %2084 = vmatprep.subr.mxu0 0.0
      %2085 = vmatpush1.msra.mxu0 0.0
      %2086 = vmatprep.subr.mxu0 0.0
      %2087 = vmatpush1.msra.mxu0 0.0
      %2088 = vmatprep.subr.mxu0 0.0
      %2089 = vmatpush1.msra.mxu0 0.0
      %2090 = vmatprep.subr.mxu0 0.0
      %2091 = vmatpush1.msra.mxu0 0.0
      %2092 = vmatprep.subr.mxu0 0.0
      %2093 = vmatpush1.msra.mxu0 0.0
      %2094 = vmatprep.subr.mxu0 0.0
      %2095 = vmatpush1.msra.mxu0 0.0
      %2096 = vmatprep.mubr.f32.mxu0 0.0
      %2097 = vmatmul.mubr.f32.gmra.mrb[0].mxu0 %v2006
      %v2098 = vpop.f32.mrb[0].mxu0
      %v2099 = vadd.f32 %v2030, %v2098
      %v2100 = vpop.f32.mrb[0].mxu0
      %2101 = vdwg.mxu0
      %s2102 = smul.u32 %s27, 8
      %s2103 = scalar_lea.vmem [#allocation9], %s2102
      %2104 = vst [vmem:[%s2103] sm:$0xff] %v2099
      %p2105 = scmp.eq.s32.totalorder %s27, 2
      // Predicated region
      $region111: #{graph_ant_forward.1} parent=71 // pred_check
        %p2106 = pneg %p2105
      $region112: #{graph_ant_forward.1} parent=71 // pred_check_branch
        %2108 = sbr.rel (%p2106) target = $region114
      $region113: #{graph_ant_forward.1} parent=71 // pred_region
        %v2109 = vld [vmem:[#allocation9] sm:$0xff]
        %v2110 = vld [vmem:[#allocation9 + $0x8] sm:$0xff]
        %v2111 = vld [vmem:[#allocation9 + $0x10] sm:$0xff]
        %v2112 = vadd.f32 %v2109, %v2110
        %v2113 = vadd.f32 %v2112, %v2111
        %v2114 = vrcp.pop 3.0
        %v2115 = vmul.f32 %v2113, %v2114
        %v2116 = vxor.u32 %v2109, 2147483648
        %v2117 = vxor.u32 %v2110, 2147483648
        %v2118 = vxor.u32 %v2111, 2147483648
        %v2119 = vmul.f32 %v2116, 1.442695
        %v2120 = vpow.pop %v2119
        %v2121 = vmul.f32 %v2117, 1.442695
        %v2122 = vpow.pop %v2121
        %v2123 = vmul.f32 %v2118, 1.442695
        %v2124 = vpow.pop %v2123
        %v2125 = vadd.f32 %v2120, 1.0
        %v2126 = vadd.f32 %v2122, 1.0
        %v2127 = vadd.f32 %v2124, 1.0
        %v2128 = vrcp.pop %v2125
        %v2129 = vmul.f32 1.0, %v2128
        %v2130 = vrcp.pop %v2126
        %v2131 = vmul.f32 1.0, %v2130
        %v2132 = vrcp.pop %v2127
        %v2133 = vmul.f32 1.0, %v2132
        %v2134 = vadd.f32 %v2129, %v2131
        %v2135 = vadd.f32 %v2134, %v2133
        %v2136 = vmul.f32 %v2135, %v2114
        %v2137 = vsub.f32 %v2129, %v2136
        %v2138 = vsub.f32 %v2131, %v2136
        %v2139 = vsub.f32 %v2133, %v2136
        %v2140 = vmul.f32 %v2137, %v2137
        %v2141 = vmul.f32 %v2138, %v2138
        %v2142 = vmul.f32 %v2139, %v2139
        %v2143 = vadd.f32 %v2140, %v2141
        %v2144 = vadd.f32 %v2143, %v2142
        %v2145 = vrcp.pop 2.0
        %v2146 = vmul.f32 %v2144, %v2145
        %v2147 = vrsqrt.pop %v2146
        %v2148 = vmul.f32 %v2146, %v2147
        %vm2149 = vcmp.eq.f32.partialorder %v2146, inf
        %v2150 = vsel %vm2149, %v2146, %v2148
        %vm2151 = vcmp.eq.f32.partialorder %v2146, 0.0
        %v2152 = vand.u32 %v2146, 2147483648
        %v2153 = vsel %vm2151, %v2152, %v2150
        %v2154 = vlaneseq
        %v2155 = vand.u32 %v2154, 127
        %vm2156 = vcmp.lt.s32.totalorder %v2155, 10
        %v2157 = vsel %vm2156, 1, 0
        %v2158 = vcvt.s32.f32 %v2157
        %v2159 = vmul.f32 %v2153, %v2158
        %2160 = vadd.xlane.f32.xlu0 %v2159
        %v2161 = vpop.xlane.xlu0 %2160
        %v2162 = vmul.f32 %v2161, 0.1
        %v2163 = vmul.f32 %v2162, 1.442695
        %v2164 = vpow.pop %v2163
        %v2165 = vadd.f32 %v2164, 1.0
        %v2166 = vrcp.pop %v2165
        %v2167 = vmul.f32 %v2115, %v2166
        %2168 = vst [vmem:[%s14] sm:$0xff] %v2167
        %2169 = vst [vmem:[%s15] sm:$0xff] %v2153
      $region114: #{graph_ant_forward.1} parent=71 // pred_fallthru
        _
      // Predicated region
      $region115: #{graph_ant_forward.1} parent=71 // pred_check
        %p2170 = pneg %p313
      $region116: #{graph_ant_forward.1} parent=71 // pred_check_branch
        %2172 = sbr.rel (%p2170) target = $region118
      $region117: #{graph_ant_forward.1} parent=71 // pred_region
        _
      $region118: #{graph_ant_forward.1} parent=71 // pred_fallthru
        _
      // Predicated region
      $region119: #{graph_ant_forward.1} parent=71 // pred_check
        %p2173 = pneg %p334
      $region120: #{graph_ant_forward.1} parent=71 // pred_check_branch
        %2175 = sbr.rel (%p2173) target = $region122
      $region121: #{graph_ant_forward.1} parent=71 // pred_region
        _
      $region122: #{graph_ant_forward.1} parent=71 // pred_fallthru
        _
      // Predicated region
      $region123: #{graph_ant_forward.1} parent=71 // pred_check
        %p2176 = pneg %p313
      $region124: #{graph_ant_forward.1} parent=71 // pred_check_branch
        %2178 = sbr.rel (%p2176) target = $region126
      $region125: #{graph_ant_forward.1} parent=71 // pred_region
        _
      $region126: #{graph_ant_forward.1} parent=71 // pred_fallthru
        _
      // Predicated region
      $region127: #{graph_ant_forward.1} parent=71 // pred_check
        %p2179 = pneg %p334
      $region128: #{graph_ant_forward.1} parent=71 // pred_check_branch
        %2181 = sbr.rel (%p2179) target = $region130
      $region129: #{graph_ant_forward.1} parent=71 // pred_region
        _
      $region130: #{graph_ant_forward.1} parent=71 // pred_fallthru
        _
    $region72: #{graph_ant_forward.1} parent=5 // pred_fallthru
      _
    %p2182 = scmp.le.s32.totalorder 2, %s22
    // Predicated region
    $region131: #{graph_ant_forward.1} parent=5 // pred_check
      %p2183 = pneg %p2182
    $region132: #{graph_ant_forward.1} parent=5 // pred_check_branch
      %2185 = sbr.rel (%p2183) target = $region134
    $region133: #{graph_ant_forward.1} parent=5 // pred_region
      %s2186 = ssub.s32 %s22, 2
    $region134: #{graph_ant_forward.1} parent=5 // pred_fallthru
      _
  $region6: #{graph_ant_forward.1} parent=0 // loop_footer
    %s26 = sadd.s32 1, %s22
  $region7: #{graph_ant_forward.1} parent=0 // loop_footer_branch
    %21 = sbr.rel target = $region3
  $region8: #{graph_ant_forward.1} parent=0 // loop_exit
    _
  %2187 = vsyncmov [#allocation3]
  %s2188 = vpop.sfrf %2187
  %p2189 = scmp.eq.s32.totalorder %s2188, 0
  %p2190 = pneg %p2189
  %2192 = shalt.err (%p2190)

</llo_original>
